<compile_context>
chip_gen: v7x
topology: tpu7x:2x2x1
jax: 0.10.0
libtpu: 0.0.40
codegen_flags: <defaults>
</compile_context>

<pallas_src>
import jax
import jax.numpy as jnp
from jax import lax
from jax.experimental import pallas as pl
from jax.experimental.pallas import tpu as pltpu

EPS = 1e-5              # PyTorch BatchNorm1d default eps
NEG_SLOPE = 0.01        # F.leaky_relu default negative_slope
NUM_POSITIONS = 200     # board tokens per sample
PADDED_POSITIONS = 256  # layer-1 K dim padded to a multiple of 128
MAX_BATCH_TILE = 1024   # ~12-16 MiB/step with double buffering -> fits every chip
SPLIT_THRESHOLD = 512   # <=512 rows: single grid step; >512: >=2 steps for v7x megacore
MIN_BATCH_PAD = 16      # bf16 packs 16 rows/vreg; avoid mostly-masked packs at tiny B


def _round_up(x, m):
    return -(-x // m) * m


def _mlp_kernel(h0_ref,
                w1_ref, b1_ref,
                w2_ref, b2_ref,
                w3_ref, b3_ref,
                w5_ref, b5_ref,
                out_ref):
    """One batch tile of: 3x (Linear+foldedBN -> leaky_relu) -> Linear(256->1).

    Weights bf16 (BN pre-folded), biases f32; all matmuls accumulate in f32.
    Dropout layers are identity (eval mode).
    """
    def leaky(h):
        # leaky_relu(h) == max(h, 0.01*h): mul+max (2 VPU ops) vs cmp+select+mul (3).
        return jnp.maximum(h, NEG_SLOPE * h)

    # l1 + bn1 (folded) + leaky_relu   [dropout1: identity in eval]
    h = jnp.dot(h0_ref[...], w1_ref[...],
                preferred_element_type=jnp.float32) + b1_ref[...]
    h = leaky(h).astype(jnp.bfloat16)

    # l2 + bn2 (folded) + leaky_relu   [dropout2: identity in eval]
    h = jnp.dot(h, w2_ref[...],
                preferred_element_type=jnp.float32) + b2_ref[...]
    h = leaky(h).astype(jnp.bfloat16)

    # l3 + bn3 (folded) + leaky_relu   [dropout3 defined but unused in forward]
    h = jnp.dot(h, w3_ref[...],
                preferred_element_type=jnp.float32) + b3_ref[...]
    h = leaky(h)  # keep f32 for the scalar head

    # l5: 256 -> 1 head, lane-dense output.  (1,256) contracted with (TB,256) on the
    # shared 256 axis -> (1, TB): batch lands on lanes (unmasked vst), negligible MXU
    # cost vs the main matmuls.
    out_ref[...] = lax.dot_general(
        w5_ref[...], h,
        dimension_numbers=(((1,), (1,)), ((), ())),
        preferred_element_type=jnp.float32) + b5_ref[...]


def prepare_params(params, embedding_dim=1):
    """One-time host-side prep: fold BN into the Linears, pad K of layer 1, cast bf16."""
    def fold(w, b, g, be, m, v):
        s = g / jnp.sqrt(v + EPS)            # (1, N)
        return w * s, (b - m) * s + be       # column-scaled weights, adjusted bias

    w1f, b1f = fold(params["w1"], params["b1"], params["g1"], params["be1"],
                    params["m1"], params["v1"])
    w2f, b2f = fold(params["w2"], params["b2"], params["g2"], params["be2"],
                    params["m2"], params["v2"])
    w3f, b3f = fold(params["w3"], params["b3"], params["g3"], params["be3"],
                    params["m3"], params["v3"])

    # Zero-pad layer-1 rows for the padded token positions (200 -> 256): padded h0
    # columns then contribute exactly 0 regardless of the pad token index.
    pad_rows = (PADDED_POSITIONS - NUM_POSITIONS) * embedding_dim
    w1f = jnp.pad(w1f, ((0, pad_rows), (0, 0)))

    # bf16 weights vs the f32 PyTorch reference give ~1e-2 relative eval error.
    return dict(
        emb=params["emb"].astype(jnp.bfloat16),            # (200, E) bf16 table
        w1=w1f.astype(jnp.bfloat16), b1=b1f.astype(jnp.float32),
        w2=w2f.astype(jnp.bfloat16), b2=b2f.astype(jnp.float32),
        w3=w3f.astype(jnp.bfloat16), b3=b3f.astype(jnp.float32),
        # scalar head kept f32 (only 257 values; avoids extra rounding)
        w5=params["w5"].reshape(1, -1).astype(jnp.float32),   # (1, 256)
        b5=params["b5"].reshape(1, 1).astype(jnp.float32),    # (1, 1)
    )


def mlp_engine_forward(x_idx, prep, *, embedding_dim=1):
    """x_idx: int32 (B, 200) board-token indices. Returns (B, 1) float32."""
    B = x_idx.shape[0]
    feat = PADDED_POSITIONS * embedding_dim

    # --- batch tiling -------------------------------------------------------
    b16 = max(_round_up(B, MIN_BATCH_PAD), MIN_BATCH_PAD)
    if b16 <= SPLIT_THRESHOLD:
        TB = b16                               # one grid step, block == full array
    else:
        # >= 2 grid steps so both v7x TensorCores get work; tile a multiple of 256
        # (sublane/lane legal for every block), capped so VMEM fits on all chips.
        TB = min(MAX_BATCH_TILE, _round_up(pl.cdiv(b16, 2), 256))
    b_pad = _round_up(b16, TB)                 # no block ever reads out-of-bounds rows
    grid = (b_pad // TB,)

    # --- embedding gather + flatten (eval-mode .view(bs,-1)) ----------------
    # Data-dependent gather over a 200-row bf16 table -> single XLA gather feeding the
    # kernel (emits bf16 h0 directly).  Pad token positions 200->256 and batch rows
    # B->b_pad with index 0; the matching w1 rows are zero / the rows are sliced off.
    x_pad = jnp.pad(x_idx, ((0, b_pad - B),
                            (0, PADDED_POSITIONS - NUM_POSITIONS)))
    h0 = prep["emb"][x_pad].reshape(b_pad, feat)            # (b_pad, 256*E) bf16

    def resident(a):
        # Full-array block with a constant index_map: Mosaic keeps the block
        # VMEM-resident across grid steps (no per-step re-DMA of the weights).
        return pl.BlockSpec(a.shape, lambda i: (0, 0))

    args = (h0,
            prep["w1"], prep["b1"],
            prep["w2"], prep["b2"],
            prep["w3"], prep["b3"],
            prep["w5"], prep["b5"])

    in_specs = [pl.BlockSpec((TB, feat), lambda i: (i, 0))] + \
               [resident(a) for a in args[1:]]

    out_row = pl.pallas_call(
        _mlp_kernel,
        grid=grid,
        in_specs=in_specs,
        out_specs=pl.BlockSpec((1, TB), lambda i: (0, i)),   # lane-dense output slab
        out_shape=jax.ShapeDtypeStruct((1, b_pad), jnp.float32),
        compiler_params=pltpu.CompilerParams(
            dimension_semantics=("parallel",),   # megacore split on v7x; no-op elsewhere
            vmem_limit_bytes=32 << 20),          # ~12-16 MiB actual at TB=1024
    )(*args)

    return out_row[0, :B].reshape(B, 1)


def init_params(key, embedding_dim=1):
    """Deterministic synthetic init mimicking the module's __init__ shapes (f32)."""
    keys = jax.random.split(key, 9)

    def linear(kw, kb, fan_in, fan_out, kaiming=True):
        bound_w = (6.0 / fan_in) ** 0.5 if kaiming else (1.0 / fan_in) ** 0.5
        w = jax.random.uniform(kw, (fan_in, fan_out), jnp.float32, -bound_w, bound_w)
        bound_b = (1.0 / fan_in) ** 0.5
        b = jax.random.uniform(kb, (1, fan_out), jnp.float32, -bound_b, bound_b)
        return w, b

    d_in = NUM_POSITIONS * embedding_dim
    emb_bound = (6.0 / embedding_dim) ** 0.5
    emb = jax.random.uniform(keys[0], (NUM_POSITIONS, embedding_dim), jnp.float32,
                             -emb_bound, emb_bound)
    w1, b1 = linear(keys[1], keys[2], d_in, 1024)
    w2, b2 = linear(keys[3], keys[4], 1024, 512)
    w3, b3 = linear(keys[5], keys[6], 512, 256)
    w5, b5 = linear(keys[7], keys[8], 256, 1, kaiming=False)

    def bn(n):
        # PyTorch BatchNorm1d defaults: gamma=1, beta=0, running_mean=0, running_var=1.
        return (jnp.ones((1, n), jnp.float32), jnp.zeros((1, n), jnp.float32),
                jnp.zeros((1, n), jnp.float32), jnp.ones((1, n), jnp.float32))

    g1, be1, m1, v1 = bn(1024)
    g2, be2, m2, v2 = bn(512)
    g3, be3, m3, v3 = bn(256)

    return dict(emb=emb,
                w1=w1, b1=b1, g1=g1, be1=be1, m1=m1, v1=v1,
                w2=w2, b2=b2, g2=g2, be2=be2, m2=m2, v2=v2,
                w3=w3, b3=b3, g3=g3, be3=be3, m3=m3, v3=v3,
                w5=w5, b5=b5)


def _reference_forward(x_idx, p):
    """Pure-JAX f32 reference of the original module (eval mode, unfolded BN)."""
    B = x_idx.shape[0]
    h = p["emb"][x_idx].reshape(B, -1).astype(jnp.float32)

    def lin(h, w, b):
        return jnp.dot(h, w, precision=jax.lax.Precision.HIGHEST) + b

    def bn(h, g, be, m, v):
        return (h - m) / jnp.sqrt(v + EPS) * g + be

    def leaky(h):
        return jnp.where(h > 0, h, NEG_SLOPE * h)

    h = leaky(bn(lin(h, p["w1"], p["b1"]), p["g1"], p["be1"], p["m1"], p["v1"]))
    h = leaky(bn(lin(h, p["w2"], p["b2"]), p["g2"], p["be2"], p["m2"], p["v2"]))
    h = leaky(bn(lin(h, p["w3"], p["b3"]), p["g3"], p["be3"], p["m3"], p["v3"]))
    return lin(h, p["w5"], p["b5"])


if __name__ == "__main__":
    key = jax.random.PRNGKey(0)
    k_param, k_x = jax.random.split(key)

    embedding_dim = 1
    batch = 2  # bs_eval
    params = init_params(k_param, embedding_dim=embedding_dim)
    prep = prepare_params(params, embedding_dim=embedding_dim)   # one-time host prep
    x_idx = jax.random.randint(k_x, (batch, NUM_POSITIONS), 0, NUM_POSITIONS,
                               dtype=jnp.int32)

    fwd = jax.jit(lambda xi, pp: mlp_engine_forward(xi, pp, embedding_dim=embedding_dim))
    out = jax.block_until_ready(fwd(x_idx, prep))

    assert out.shape == (batch, 1) and out.dtype == jnp.float32
    assert bool(jnp.all(jnp.isfinite(out)))

    # bf16 weights/activations vs the f32 reference -> expect ~1e-2 relative error.
    ref = _reference_forward(x_idx, params)
    assert bool(jnp.allclose(out, ref, rtol=2e-2, atol=2e-2)), (out, ref)

    print("KERNEL_OK")
</pallas_src>

<mosaic_0001>
module attributes {stable_mosaic.version = 11 : i64} {
  func.func @_mlp_kernel(%arg0: i32, %arg1: memref<16x256xbf16, #tpu.memory_space<vmem>>, %arg2: memref<256x1024xbf16, #tpu.memory_space<vmem>>, %arg3: memref<1x1024xf32, #tpu.memory_space<vmem>>, %arg4: memref<1024x512xbf16, #tpu.memory_space<vmem>>, %arg5: memref<1x512xf32, #tpu.memory_space<vmem>>, %arg6: memref<512x256xbf16, #tpu.memory_space<vmem>>, %arg7: memref<1x256xf32, #tpu.memory_space<vmem>>, %arg8: memref<1x256xf32, #tpu.memory_space<vmem>>, %arg9: memref<1x1xf32, #tpu.memory_space<vmem>>, %arg10: memref<1x16xf32, #tpu.memory_space<vmem>>) attributes {dimension_semantics = [#tpu.dimension_semantics<parallel>], iteration_bounds = array<i64: 1>, scalar_prefetch = 0 : i64, scratch_operands = 0 : i64, tpu.core_type = #tpu.core_type<tc>, window_params = [{transform_indices = @transform_0, window_bounds = array<i64: 16, 256>}, {pipeline_mode = #tpu.pipeline_mode<synchronous>, transform_indices = @transform_1, window_bounds = array<i64: 256, 1024>}, {pipeline_mode = #tpu.pipeline_mode<synchronous>, transform_indices = @transform_2, window_bounds = array<i64: 1, 1024>}, {pipeline_mode = #tpu.pipeline_mode<synchronous>, transform_indices = @transform_3, window_bounds = array<i64: 1024, 512>}, {pipeline_mode = #tpu.pipeline_mode<synchronous>, transform_indices = @transform_4, window_bounds = array<i64: 1, 512>}, {pipeline_mode = #tpu.pipeline_mode<synchronous>, transform_indices = @transform_5, window_bounds = array<i64: 512, 256>}, {pipeline_mode = #tpu.pipeline_mode<synchronous>, transform_indices = @transform_6, window_bounds = array<i64: 1, 256>}, {pipeline_mode = #tpu.pipeline_mode<synchronous>, transform_indices = @transform_7, window_bounds = array<i64: 1, 256>}, {pipeline_mode = #tpu.pipeline_mode<synchronous>, transform_indices = @transform_8, window_bounds = array<i64: 1, 1>}, {transform_indices = @transform_9, window_bounds = array<i64: 1, 16>}]} {
    %c0 = arith.constant 0 : index
    %c0_0 = arith.constant 0 : index
    %0 = vector.load %arg1[%c0, %c0_0] : memref<16x256xbf16, #tpu.memory_space<vmem>>, vector<16x256xbf16>
    %c0_1 = arith.constant 0 : index
    %c0_2 = arith.constant 0 : index
    %1 = vector.load %arg2[%c0_1, %c0_2] : memref<256x1024xbf16, #tpu.memory_space<vmem>>, vector<256x1024xbf16>
    %cst = arith.constant dense<0.000000e+00> : vector<16x1024xf32>
    %2 = tpu.matmul %0, %1, %cst {dimension_numbers = #tpu.dot_dimension_numbers<[1], [0], [0], [1], [0, 0, 1, 1], [], []>} : vector<16x256xbf16>, vector<256x1024xbf16>, vector<16x1024xf32> -> vector<16x1024xf32>
    %c0_3 = arith.constant 0 : index
    %c0_4 = arith.constant 0 : index
    %3 = vector.load %arg3[%c0_3, %c0_4] : memref<1x1024xf32, #tpu.memory_space<vmem>>, vector<1x1024xf32>
    %4 = vector.broadcast %3 : vector<1x1024xf32> to vector<16x1024xf32>
    %5 = arith.addf %2, %4 : vector<16x1024xf32>
    %cst_5 = arith.constant 0.00999999977 : f32
    %6 = vector.broadcast %cst_5 : f32 to vector<16x1024xf32>
    %7 = arith.mulf %6, %5 : vector<16x1024xf32>
    %8 = arith.maximumf %5, %7 : vector<16x1024xf32>
    %9 = arith.truncf %8 : vector<16x1024xf32> to vector<16x1024xbf16>
    %c0_6 = arith.constant 0 : index
    %c0_7 = arith.constant 0 : index
    %10 = vector.load %arg4[%c0_6, %c0_7] : memref<1024x512xbf16, #tpu.memory_space<vmem>>, vector<1024x512xbf16>
    %cst_8 = arith.constant dense<0.000000e+00> : vector<16x512xf32>
    %11 = tpu.matmul %9, %10, %cst_8 {dimension_numbers = #tpu.dot_dimension_numbers<[1], [0], [0], [1], [0, 0, 1, 1], [], []>} : vector<16x1024xbf16>, vector<1024x512xbf16>, vector<16x512xf32> -> vector<16x512xf32>
    %c0_9 = arith.constant 0 : index
    %c0_10 = arith.constant 0 : index
    %12 = vector.load %arg5[%c0_9, %c0_10] : memref<1x512xf32, #tpu.memory_space<vmem>>, vector<1x512xf32>
    %13 = vector.broadcast %12 : vector<1x512xf32> to vector<16x512xf32>
    %14 = arith.addf %11, %13 : vector<16x512xf32>
    %cst_11 = arith.constant 0.00999999977 : f32
    %15 = vector.broadcast %cst_11 : f32 to vector<16x512xf32>
    %16 = arith.mulf %15, %14 : vector<16x512xf32>
    %17 = arith.maximumf %14, %16 : vector<16x512xf32>
    %18 = arith.truncf %17 : vector<16x512xf32> to vector<16x512xbf16>
    %c0_12 = arith.constant 0 : index
    %c0_13 = arith.constant 0 : index
    %19 = vector.load %arg6[%c0_12, %c0_13] : memref<512x256xbf16, #tpu.memory_space<vmem>>, vector<512x256xbf16>
    %cst_14 = arith.constant dense<0.000000e+00> : vector<16x256xf32>
    %20 = tpu.matmul %18, %19, %cst_14 {dimension_numbers = #tpu.dot_dimension_numbers<[1], [0], [0], [1], [0, 0, 1, 1], [], []>} : vector<16x512xbf16>, vector<512x256xbf16>, vector<16x256xf32> -> vector<16x256xf32>
    %c0_15 = arith.constant 0 : index
    %c0_16 = arith.constant 0 : index
    %21 = vector.load %arg7[%c0_15, %c0_16] : memref<1x256xf32, #tpu.memory_space<vmem>>, vector<1x256xf32>
    %22 = vector.broadcast %21 : vector<1x256xf32> to vector<16x256xf32>
    %23 = arith.addf %20, %22 : vector<16x256xf32>
    %cst_17 = arith.constant 0.00999999977 : f32
    %24 = vector.broadcast %cst_17 : f32 to vector<16x256xf32>
    %25 = arith.mulf %24, %23 : vector<16x256xf32>
    %26 = arith.maximumf %23, %25 : vector<16x256xf32>
    %c0_18 = arith.constant 0 : index
    %c0_19 = arith.constant 0 : index
    %27 = vector.load %arg8[%c0_18, %c0_19] : memref<1x256xf32, #tpu.memory_space<vmem>>, vector<1x256xf32>
    %cst_20 = arith.constant dense<0.000000e+00> : vector<1x16xf32>
    %28 = tpu.matmul %27, %26, %cst_20 {dimension_numbers = #tpu.dot_dimension_numbers<[1], [1], [0], [0], [0, 0, 1, 0], [], []>} : vector<1x256xf32>, vector<16x256xf32>, vector<1x16xf32> -> vector<1x16xf32>
    %c0_21 = arith.constant 0 : index
    %c0_22 = arith.constant 0 : index
    %29 = vector.load %arg9[%c0_21, %c0_22] : memref<1x1xf32, #tpu.memory_space<vmem>>, vector<1x1xf32>
    %30 = vector.broadcast %29 : vector<1x1xf32> to vector<1x16xf32>
    %31 = arith.addf %28, %30 : vector<1x16xf32>
    %c0_23 = arith.constant 0 : index
    %c0_24 = arith.constant 0 : index
    %32 = vector.load %arg10[%c0_23, %c0_24] : memref<1x16xf32, #tpu.memory_space<vmem>>, vector<1x16xf32>
    tpu.vector_store %arg10[%c0_23, %c0_24], %31 {strides = array<i32>} : memref<1x16xf32, #tpu.memory_space<vmem>>, vector<1x16xf32>,
    return
  }
  func.func @transform_0(%arg0: i32) -> (i32, i32) {
    %c0_i32 = arith.constant 0 : i32
    %c0_i32_0 = arith.constant 0 : i32
    return %arg0, %c0_i32 : i32, i32
  }
  func.func @transform_1(%arg0: i32) -> (i32, i32) {
    %c0_i32 = arith.constant 0 : i32
    %c0_i32_0 = arith.constant 0 : i32
    %c0_i32_1 = arith.constant 0 : i32
    return %c0_i32, %c0_i32_0 : i32, i32
  }
  func.func @transform_2(%arg0: i32) -> (i32, i32) {
    %c0_i32 = arith.constant 0 : i32
    %c0_i32_0 = arith.constant 0 : i32
    %c0_i32_1 = arith.constant 0 : i32
    return %c0_i32, %c0_i32_0 : i32, i32
  }
  func.func @transform_3(%arg0: i32) -> (i32, i32) {
    %c0_i32 = arith.constant 0 : i32
    %c0_i32_0 = arith.constant 0 : i32
    %c0_i32_1 = arith.constant 0 : i32
    return %c0_i32, %c0_i32_0 : i32, i32
  }
  func.func @transform_4(%arg0: i32) -> (i32, i32) {
    %c0_i32 = arith.constant 0 : i32
    %c0_i32_0 = arith.constant 0 : i32
    %c0_i32_1 = arith.constant 0 : i32
    return %c0_i32, %c0_i32_0 : i32, i32
  }
  func.func @transform_5(%arg0: i32) -> (i32, i32) {
    %c0_i32 = arith.constant 0 : i32
    %c0_i32_0 = arith.constant 0 : i32
    %c0_i32_1 = arith.constant 0 : i32
    return %c0_i32, %c0_i32_0 : i32, i32
  }
  func.func @transform_6(%arg0: i32) -> (i32, i32) {
    %c0_i32 = arith.constant 0 : i32
    %c0_i32_0 = arith.constant 0 : i32
    %c0_i32_1 = arith.constant 0 : i32
    return %c0_i32, %c0_i32_0 : i32, i32
  }
  func.func @transform_7(%arg0: i32) -> (i32, i32) {
    %c0_i32 = arith.constant 0 : i32
    %c0_i32_0 = arith.constant 0 : i32
    %c0_i32_1 = arith.constant 0 : i32
    return %c0_i32, %c0_i32_0 : i32, i32
  }
  func.func @transform_8(%arg0: i32) -> (i32, i32) {
    %c0_i32 = arith.constant 0 : i32
    %c0_i32_0 = arith.constant 0 : i32
    %c0_i32_1 = arith.constant 0 : i32
    return %c0_i32, %c0_i32_0 : i32, i32
  }
  func.func @transform_9(%arg0: i32) -> (i32, i32) {
    %c0_i32 = arith.constant 0 : i32
    %c0_i32_0 = arith.constant 0 : i32
    return %c0_i32, %arg0 : i32, i32
  }
}

</mosaic_0001>

<llo_original>
// kernel: _lambda_.1
$region0: #{_lambda_.1}
  #allocation0 [shape = 'u32[]', space=smem, size = 0x4, offset = 0x4, fixed_abs, tag = 'smem constant byte address 0x4 - core index']
  #allocation1 [shape = 'u32[144,128]{1,0:T(1,128)}', space=vmem, size = 0x12000, scoped, tag = 'internal scratch']
  #allocation2 [shape = 'f32[1,1]{1,0:T(1,128)S(1)}', space=vmem, size = 0x200, scoped, tag = 'scoped memory for _lambda_.1']
  %s0 = inlined_call_operand.vmem [shape: bf16[16,256], index: 0, kind: input, shape index: {}]
  %s1 = inlined_call_operand.vmem [shape: bf16[256,1024], index: 1, kind: input, shape index: {}]
  %s2 = inlined_call_operand.vmem [shape: f32[1,1024], index: 2, kind: input, shape index: {}]
  %s3 = inlined_call_operand.vmem [shape: bf16[1024,512], index: 3, kind: input, shape index: {}]
  %s4 = inlined_call_operand.vmem [shape: f32[1,512], index: 4, kind: input, shape index: {}]
  %s5 = inlined_call_operand.vmem [shape: bf16[512,256], index: 5, kind: input, shape index: {}]
  %s6 = inlined_call_operand.vmem [shape: f32[1,256], index: 6, kind: input, shape index: {}]
  %s7 = inlined_call_operand.vmem [shape: f32[1,256], index: 7, kind: input, shape index: {}]
  %s8 = inlined_call_operand.<no memory space> [shape: f32[1,1], index: 8, kind: input, shape index: {}]
  %s9 = inlined_call_operand.vmem [shape: f32[1,16], index: 9, kind: output, shape index: {}]
  %s10 = sld [smem:[#allocation0]]
  $region46: #{_lambda_.1} parent=0
    _
  %s12 = ssub.s32 1, %s10
  %s13 = scalar_select 0, %s12, %s10
  %v14 = vstv %s8
  %15 = vst [vmem:[#allocation2] sm:$0x1] %v14
  // Predicated region
  $region2: #{_lambda_.1} parent=0 // pred_check
    _
  $region3: #{_lambda_.1} parent=0 // pred_check_branch
    %17 = sbr.rel (0) target = $region5
  $region4: #{_lambda_.1} parent=0 // pred_region
    _
  $region5: #{_lambda_.1} parent=0 // pred_fallthru
    _
  // Predicated region
  $region6: #{_lambda_.1} parent=0 // pred_check
    _
  $region7: #{_lambda_.1} parent=0 // pred_check_branch
    %19 = sbr.rel (0) target = $region9
  $region8: #{_lambda_.1} parent=0 // pred_region
    _
  $region9: #{_lambda_.1} parent=0 // pred_fallthru
    _
  // Predicated region
  $region10: #{_lambda_.1} parent=0 // pred_check
    _
  $region11: #{_lambda_.1} parent=0 // pred_check_branch
    %21 = sbr.rel (0) target = $region13
  $region12: #{_lambda_.1} parent=0 // pred_region
    _
  $region13: #{_lambda_.1} parent=0 // pred_fallthru
    _
  // Predicated region
  $region14: #{_lambda_.1} parent=0 // pred_check
    _
  $region15: #{_lambda_.1} parent=0 // pred_check_branch
    %23 = sbr.rel (0) target = $region17
  $region16: #{_lambda_.1} parent=0 // pred_region
    _
  $region17: #{_lambda_.1} parent=0 // pred_fallthru
    _
  // Predicated region
  $region18: #{_lambda_.1} parent=0 // pred_check
    _
  $region19: #{_lambda_.1} parent=0 // pred_check_branch
    %25 = sbr.rel (0) target = $region21
  $region20: #{_lambda_.1} parent=0 // pred_region
    _
  $region21: #{_lambda_.1} parent=0 // pred_fallthru
    _
  // Predicated region
  $region22: #{_lambda_.1} parent=0 // pred_check
    _
  $region23: #{_lambda_.1} parent=0 // pred_check_branch
    %27 = sbr.rel (0) target = $region25
  $region24: #{_lambda_.1} parent=0 // pred_region
    _
  $region25: #{_lambda_.1} parent=0 // pred_fallthru
    _
  // Predicated region
  $region26: #{_lambda_.1} parent=0 // pred_check
    _
  $region27: #{_lambda_.1} parent=0 // pred_check_branch
    %29 = sbr.rel (0) target = $region29
  $region28: #{_lambda_.1} parent=0 // pred_region
    _
  $region29: #{_lambda_.1} parent=0 // pred_fallthru
    _
  // Predicated region
  $region30: #{_lambda_.1} parent=0 // pred_check
    _
  $region31: #{_lambda_.1} parent=0 // pred_check_branch
    %31 = sbr.rel (0) target = $region33
  $region32: #{_lambda_.1} parent=0 // pred_region
    _
  $region33: #{_lambda_.1} parent=0 // pred_fallthru
    _
  // Predicated region
  $region34: #{_lambda_.1} parent=0 // pred_check
    _
  $region35: #{_lambda_.1} parent=0 // pred_check_branch
    %33 = sbr.rel (0) target = $region37
  $region36: #{_lambda_.1} parent=0 // pred_region
    _
  $region37: #{_lambda_.1} parent=0 // pred_fallthru
    _
  %v34 = vld [vmem:[%s0] sm:$0xff]
  %v35 = vld [vmem:[%s0 + $0x8] sm:$0xff]
  %v36 = vld [vmem:[%s1] sm:$0xff]
  %v37 = vld [vmem:[%s1 + $0x8] sm:$0xff]
  %v38 = vld [vmem:[%s1 + $0x10] sm:$0xff]
  %v39 = vld [vmem:[%s1 + $0x18] sm:$0xff]
  %v40 = vld [vmem:[%s1 + $0x20] sm:$0xff]
  %v41 = vld [vmem:[%s1 + $0x28] sm:$0xff]
  %v42 = vld [vmem:[%s1 + $0x30] sm:$0xff]
  %v43 = vld [vmem:[%s1 + $0x38] sm:$0xff]
  %v44 = vld [vmem:[%s1 + $0x40] sm:$0xff]
  %v45 = vld [vmem:[%s1 + $0x48] sm:$0xff]
  %v46 = vld [vmem:[%s1 + $0x50] sm:$0xff]
  %v47 = vld [vmem:[%s1 + $0x58] sm:$0xff]
  %v48 = vld [vmem:[%s1 + $0x60] sm:$0xff]
  %v49 = vld [vmem:[%s1 + $0x68] sm:$0xff]
  %v50 = vld [vmem:[%s1 + $0x70] sm:$0xff]
  %v51 = vld [vmem:[%s1 + $0x78] sm:$0xff]
  %v52 = vld [vmem:[%s1 + $0x80] sm:$0xff]
  %v53 = vld [vmem:[%s1 + $0x88] sm:$0xff]
  %v54 = vld [vmem:[%s1 + $0x90] sm:$0xff]
  %v55 = vld [vmem:[%s1 + $0x98] sm:$0xff]
  %v56 = vld [vmem:[%s1 + $0xa0] sm:$0xff]
  %v57 = vld [vmem:[%s1 + $0xa8] sm:$0xff]
  %v58 = vld [vmem:[%s1 + $0xb0] sm:$0xff]
  %v59 = vld [vmem:[%s1 + $0xb8] sm:$0xff]
  %v60 = vld [vmem:[%s1 + $0xc0] sm:$0xff]
  %v61 = vld [vmem:[%s1 + $0xc8] sm:$0xff]
  %v62 = vld [vmem:[%s1 + $0xd0] sm:$0xff]
  %v63 = vld [vmem:[%s1 + $0xd8] sm:$0xff]
  %v64 = vld [vmem:[%s1 + $0xe0] sm:$0xff]
  %v65 = vld [vmem:[%s1 + $0xe8] sm:$0xff]
  %v66 = vld [vmem:[%s1 + $0xf0] sm:$0xff]
  %v67 = vld [vmem:[%s1 + $0xf8] sm:$0xff]
  %v68 = vld [vmem:[%s1 + $0x100] sm:$0xff]
  %v69 = vld [vmem:[%s1 + $0x108] sm:$0xff]
  %v70 = vld [vmem:[%s1 + $0x110] sm:$0xff]
  %v71 = vld [vmem:[%s1 + $0x118] sm:$0xff]
  %v72 = vld [vmem:[%s1 + $0x120] sm:$0xff]
  %v73 = vld [vmem:[%s1 + $0x128] sm:$0xff]
  %v74 = vld [vmem:[%s1 + $0x130] sm:$0xff]
  %v75 = vld [vmem:[%s1 + $0x138] sm:$0xff]
  %v76 = vld [vmem:[%s1 + $0x140] sm:$0xff]
  %v77 = vld [vmem:[%s1 + $0x148] sm:$0xff]
  %v78 = vld [vmem:[%s1 + $0x150] sm:$0xff]
  %v79 = vld [vmem:[%s1 + $0x158] sm:$0xff]
  %v80 = vld [vmem:[%s1 + $0x160] sm:$0xff]
  %v81 = vld [vmem:[%s1 + $0x168] sm:$0xff]
  %v82 = vld [vmem:[%s1 + $0x170] sm:$0xff]
  %v83 = vld [vmem:[%s1 + $0x178] sm:$0xff]
  %v84 = vld [vmem:[%s1 + $0x180] sm:$0xff]
  %v85 = vld [vmem:[%s1 + $0x188] sm:$0xff]
  %v86 = vld [vmem:[%s1 + $0x190] sm:$0xff]
  %v87 = vld [vmem:[%s1 + $0x198] sm:$0xff]
  %v88 = vld [vmem:[%s1 + $0x1a0] sm:$0xff]
  %v89 = vld [vmem:[%s1 + $0x1a8] sm:$0xff]
  %v90 = vld [vmem:[%s1 + $0x1b0] sm:$0xff]
  %v91 = vld [vmem:[%s1 + $0x1b8] sm:$0xff]
  %v92 = vld [vmem:[%s1 + $0x1c0] sm:$0xff]
  %v93 = vld [vmem:[%s1 + $0x1c8] sm:$0xff]
  %v94 = vld [vmem:[%s1 + $0x1d0] sm:$0xff]
  %v95 = vld [vmem:[%s1 + $0x1d8] sm:$0xff]
  %v96 = vld [vmem:[%s1 + $0x1e0] sm:$0xff]
  %v97 = vld [vmem:[%s1 + $0x1e8] sm:$0xff]
  %v98 = vld [vmem:[%s1 + $0x1f0] sm:$0xff]
  %v99 = vld [vmem:[%s1 + $0x1f8] sm:$0xff]
  %v100 = vld [vmem:[%s1 + $0x200] sm:$0xff]
  %v101 = vld [vmem:[%s1 + $0x208] sm:$0xff]
  %v102 = vld [vmem:[%s1 + $0x210] sm:$0xff]
  %v103 = vld [vmem:[%s1 + $0x218] sm:$0xff]
  %v104 = vld [vmem:[%s1 + $0x220] sm:$0xff]
  %v105 = vld [vmem:[%s1 + $0x228] sm:$0xff]
  %v106 = vld [vmem:[%s1 + $0x230] sm:$0xff]
  %v107 = vld [vmem:[%s1 + $0x238] sm:$0xff]
  %v108 = vld [vmem:[%s1 + $0x240] sm:$0xff]
  %v109 = vld [vmem:[%s1 + $0x248] sm:$0xff]
  %v110 = vld [vmem:[%s1 + $0x250] sm:$0xff]
  %v111 = vld [vmem:[%s1 + $0x258] sm:$0xff]
  %v112 = vld [vmem:[%s1 + $0x260] sm:$0xff]
  %v113 = vld [vmem:[%s1 + $0x268] sm:$0xff]
  %v114 = vld [vmem:[%s1 + $0x270] sm:$0xff]
  %v115 = vld [vmem:[%s1 + $0x278] sm:$0xff]
  %v116 = vld [vmem:[%s1 + $0x280] sm:$0xff]
  %v117 = vld [vmem:[%s1 + $0x288] sm:$0xff]
  %v118 = vld [vmem:[%s1 + $0x290] sm:$0xff]
  %v119 = vld [vmem:[%s1 + $0x298] sm:$0xff]
  %v120 = vld [vmem:[%s1 + $0x2a0] sm:$0xff]
  %v121 = vld [vmem:[%s1 + $0x2a8] sm:$0xff]
  %v122 = vld [vmem:[%s1 + $0x2b0] sm:$0xff]
  %v123 = vld [vmem:[%s1 + $0x2b8] sm:$0xff]
  %v124 = vld [vmem:[%s1 + $0x2c0] sm:$0xff]
  %v125 = vld [vmem:[%s1 + $0x2c8] sm:$0xff]
  %v126 = vld [vmem:[%s1 + $0x2d0] sm:$0xff]
  %v127 = vld [vmem:[%s1 + $0x2d8] sm:$0xff]
  %v128 = vld [vmem:[%s1 + $0x2e0] sm:$0xff]
  %v129 = vld [vmem:[%s1 + $0x2e8] sm:$0xff]
  %v130 = vld [vmem:[%s1 + $0x2f0] sm:$0xff]
  %v131 = vld [vmem:[%s1 + $0x2f8] sm:$0xff]
  %v132 = vld [vmem:[%s1 + $0x300] sm:$0xff]
  %v133 = vld [vmem:[%s1 + $0x308] sm:$0xff]
  %v134 = vld [vmem:[%s1 + $0x310] sm:$0xff]
  %v135 = vld [vmem:[%s1 + $0x318] sm:$0xff]
  %v136 = vld [vmem:[%s1 + $0x320] sm:$0xff]
  %v137 = vld [vmem:[%s1 + $0x328] sm:$0xff]
  %v138 = vld [vmem:[%s1 + $0x330] sm:$0xff]
  %v139 = vld [vmem:[%s1 + $0x338] sm:$0xff]
  %v140 = vld [vmem:[%s1 + $0x340] sm:$0xff]
  %v141 = vld [vmem:[%s1 + $0x348] sm:$0xff]
  %v142 = vld [vmem:[%s1 + $0x350] sm:$0xff]
  %v143 = vld [vmem:[%s1 + $0x358] sm:$0xff]
  %v144 = vld [vmem:[%s1 + $0x360] sm:$0xff]
  %v145 = vld [vmem:[%s1 + $0x368] sm:$0xff]
  %v146 = vld [vmem:[%s1 + $0x370] sm:$0xff]
  %v147 = vld [vmem:[%s1 + $0x378] sm:$0xff]
  %v148 = vld [vmem:[%s1 + $0x380] sm:$0xff]
  %v149 = vld [vmem:[%s1 + $0x388] sm:$0xff]
  %v150 = vld [vmem:[%s1 + $0x390] sm:$0xff]
  %v151 = vld [vmem:[%s1 + $0x398] sm:$0xff]
  %v152 = vld [vmem:[%s1 + $0x3a0] sm:$0xff]
  %v153 = vld [vmem:[%s1 + $0x3a8] sm:$0xff]
  %v154 = vld [vmem:[%s1 + $0x3b0] sm:$0xff]
  %v155 = vld [vmem:[%s1 + $0x3b8] sm:$0xff]
  %v156 = vld [vmem:[%s1 + $0x3c0] sm:$0xff]
  %v157 = vld [vmem:[%s1 + $0x3c8] sm:$0xff]
  %v158 = vld [vmem:[%s1 + $0x3d0] sm:$0xff]
  %v159 = vld [vmem:[%s1 + $0x3d8] sm:$0xff]
  %v160 = vld [vmem:[%s1 + $0x3e0] sm:$0xff]
  %v161 = vld [vmem:[%s1 + $0x3e8] sm:$0xff]
  %v162 = vld [vmem:[%s1 + $0x3f0] sm:$0xff]
  %v163 = vld [vmem:[%s1 + $0x3f8] sm:$0xff]
  %v164 = vld [vmem:[%s2] sm:$0xff]
  %v166 = vlaneseq
  %v167 = vshrl.u32 %v166, 7
  %v168 = vsub.s32 0, %v167
  %v169 = vrot.slane %v164, %v168
  %v170 = vlaneseq
  %v171 = vshrl.u32 %v170, 7
  %v172 = vsub.s32 1, %v171
  %v173 = vrot.slane %v164, %v172
  %v174 = vlaneseq
  %v175 = vshrl.u32 %v174, 7
  %v176 = vsub.s32 2, %v175
  %v177 = vrot.slane %v164, %v176
  %v178 = vlaneseq
  %v179 = vshrl.u32 %v178, 7
  %v180 = vsub.s32 3, %v179
  %v181 = vrot.slane %v164, %v180
  %v182 = vlaneseq
  %v183 = vshrl.u32 %v182, 7
  %v184 = vsub.s32 4, %v183
  %v185 = vrot.slane %v164, %v184
  %v186 = vlaneseq
  %v187 = vshrl.u32 %v186, 7
  %v188 = vsub.s32 5, %v187
  %v189 = vrot.slane %v164, %v188
  %v190 = vlaneseq
  %v191 = vshrl.u32 %v190, 7
  %v192 = vsub.s32 6, %v191
  %v193 = vrot.slane %v164, %v192
  %v194 = vlaneseq
  %v195 = vshrl.u32 %v194, 7
  %v196 = vsub.s32 7, %v195
  %v197 = vrot.slane %v164, %v196
  %v208 = vunpack.c.l.b16 %v34
  %v209 = vunpack.c.h.b16 %v34
  %v210 = vunpack.c.l.b16 %v35
  %v211 = vunpack.c.h.b16 %v35
  %v212 = vpack.c.b16 %v210, %v208
  %v213 = vpack.c.b16 %v211, %v209
  %v344 = vunpack.c.l.b16 %v36
  %v345 = vunpack.c.h.b16 %v36
  %v346 = vunpack.c.l.b16 %v37
  %v347 = vunpack.c.h.b16 %v37
  %v348 = vunpack.c.l.b16 %v38
  %v349 = vunpack.c.h.b16 %v38
  %v350 = vunpack.c.l.b16 %v39
  %v351 = vunpack.c.h.b16 %v39
  %v352 = vunpack.c.l.b16 %v40
  %v353 = vunpack.c.h.b16 %v40
  %v354 = vunpack.c.l.b16 %v41
  %v355 = vunpack.c.h.b16 %v41
  %v356 = vunpack.c.l.b16 %v42
  %v357 = vunpack.c.h.b16 %v42
  %v358 = vunpack.c.l.b16 %v43
  %v359 = vunpack.c.h.b16 %v43
  %v360 = vunpack.c.l.b16 %v44
  %v361 = vunpack.c.h.b16 %v44
  %v362 = vunpack.c.l.b16 %v45
  %v363 = vunpack.c.h.b16 %v45
  %v364 = vunpack.c.l.b16 %v46
  %v365 = vunpack.c.h.b16 %v46
  %v366 = vunpack.c.l.b16 %v47
  %v367 = vunpack.c.h.b16 %v47
  %v368 = vunpack.c.l.b16 %v48
  %v369 = vunpack.c.h.b16 %v48
  %v370 = vunpack.c.l.b16 %v49
  %v371 = vunpack.c.h.b16 %v49
  %v372 = vunpack.c.l.b16 %v50
  %v373 = vunpack.c.h.b16 %v50
  %v374 = vunpack.c.l.b16 %v51
  %v375 = vunpack.c.h.b16 %v51
  %v376 = vunpack.c.l.b16 %v52
  %v377 = vunpack.c.h.b16 %v52
  %v378 = vunpack.c.l.b16 %v53
  %v379 = vunpack.c.h.b16 %v53
  %v380 = vunpack.c.l.b16 %v54
  %v381 = vunpack.c.h.b16 %v54
  %v382 = vunpack.c.l.b16 %v55
  %v383 = vunpack.c.h.b16 %v55
  %v384 = vunpack.c.l.b16 %v56
  %v385 = vunpack.c.h.b16 %v56
  %v386 = vunpack.c.l.b16 %v57
  %v387 = vunpack.c.h.b16 %v57
  %v388 = vunpack.c.l.b16 %v58
  %v389 = vunpack.c.h.b16 %v58
  %v390 = vunpack.c.l.b16 %v59
  %v391 = vunpack.c.h.b16 %v59
  %v392 = vunpack.c.l.b16 %v60
  %v393 = vunpack.c.h.b16 %v60
  %v394 = vunpack.c.l.b16 %v61
  %v395 = vunpack.c.h.b16 %v61
  %v396 = vunpack.c.l.b16 %v62
  %v397 = vunpack.c.h.b16 %v62
  %v398 = vunpack.c.l.b16 %v63
  %v399 = vunpack.c.h.b16 %v63
  %v400 = vunpack.c.l.b16 %v64
  %v401 = vunpack.c.h.b16 %v64
  %v402 = vunpack.c.l.b16 %v65
  %v403 = vunpack.c.h.b16 %v65
  %v404 = vunpack.c.l.b16 %v66
  %v405 = vunpack.c.h.b16 %v66
  %v406 = vunpack.c.l.b16 %v67
  %v407 = vunpack.c.h.b16 %v67
  %v408 = vunpack.c.l.b16 %v68
  %v409 = vunpack.c.h.b16 %v68
  %v410 = vunpack.c.l.b16 %v69
  %v411 = vunpack.c.h.b16 %v69
  %v412 = vunpack.c.l.b16 %v70
  %v413 = vunpack.c.h.b16 %v70
  %v414 = vunpack.c.l.b16 %v71
  %v415 = vunpack.c.h.b16 %v71
  %v416 = vunpack.c.l.b16 %v72
  %v417 = vunpack.c.h.b16 %v72
  %v418 = vunpack.c.l.b16 %v73
  %v419 = vunpack.c.h.b16 %v73
  %v420 = vunpack.c.l.b16 %v74
  %v421 = vunpack.c.h.b16 %v74
  %v422 = vunpack.c.l.b16 %v75
  %v423 = vunpack.c.h.b16 %v75
  %v424 = vunpack.c.l.b16 %v76
  %v425 = vunpack.c.h.b16 %v76
  %v426 = vunpack.c.l.b16 %v77
  %v427 = vunpack.c.h.b16 %v77
  %v428 = vunpack.c.l.b16 %v78
  %v429 = vunpack.c.h.b16 %v78
  %v430 = vunpack.c.l.b16 %v79
  %v431 = vunpack.c.h.b16 %v79
  %v432 = vunpack.c.l.b16 %v80
  %v433 = vunpack.c.h.b16 %v80
  %v434 = vunpack.c.l.b16 %v81
  %v435 = vunpack.c.h.b16 %v81
  %v436 = vunpack.c.l.b16 %v82
  %v437 = vunpack.c.h.b16 %v82
  %v438 = vunpack.c.l.b16 %v83
  %v439 = vunpack.c.h.b16 %v83
  %v440 = vunpack.c.l.b16 %v84
  %v441 = vunpack.c.h.b16 %v84
  %v442 = vunpack.c.l.b16 %v85
  %v443 = vunpack.c.h.b16 %v85
  %v444 = vunpack.c.l.b16 %v86
  %v445 = vunpack.c.h.b16 %v86
  %v446 = vunpack.c.l.b16 %v87
  %v447 = vunpack.c.h.b16 %v87
  %v448 = vunpack.c.l.b16 %v88
  %v449 = vunpack.c.h.b16 %v88
  %v450 = vunpack.c.l.b16 %v89
  %v451 = vunpack.c.h.b16 %v89
  %v452 = vunpack.c.l.b16 %v90
  %v453 = vunpack.c.h.b16 %v90
  %v454 = vunpack.c.l.b16 %v91
  %v455 = vunpack.c.h.b16 %v91
  %v456 = vunpack.c.l.b16 %v92
  %v457 = vunpack.c.h.b16 %v92
  %v458 = vunpack.c.l.b16 %v93
  %v459 = vunpack.c.h.b16 %v93
  %v460 = vunpack.c.l.b16 %v94
  %v461 = vunpack.c.h.b16 %v94
  %v462 = vunpack.c.l.b16 %v95
  %v463 = vunpack.c.h.b16 %v95
  %v464 = vunpack.c.l.b16 %v96
  %v465 = vunpack.c.h.b16 %v96
  %v466 = vunpack.c.l.b16 %v97
  %v467 = vunpack.c.h.b16 %v97
  %v468 = vunpack.c.l.b16 %v98
  %v469 = vunpack.c.h.b16 %v98
  %v470 = vunpack.c.l.b16 %v99
  %v471 = vunpack.c.h.b16 %v99
  %v472 = vunpack.c.l.b16 %v100
  %v473 = vunpack.c.h.b16 %v100
  %v474 = vunpack.c.l.b16 %v101
  %v475 = vunpack.c.h.b16 %v101
  %v476 = vunpack.c.l.b16 %v102
  %v477 = vunpack.c.h.b16 %v102
  %v478 = vunpack.c.l.b16 %v103
  %v479 = vunpack.c.h.b16 %v103
  %v480 = vunpack.c.l.b16 %v104
  %v481 = vunpack.c.h.b16 %v104
  %v482 = vunpack.c.l.b16 %v105
  %v483 = vunpack.c.h.b16 %v105
  %v484 = vunpack.c.l.b16 %v106
  %v485 = vunpack.c.h.b16 %v106
  %v486 = vunpack.c.l.b16 %v107
  %v487 = vunpack.c.h.b16 %v107
  %v488 = vunpack.c.l.b16 %v108
  %v489 = vunpack.c.h.b16 %v108
  %v490 = vunpack.c.l.b16 %v109
  %v491 = vunpack.c.h.b16 %v109
  %v492 = vunpack.c.l.b16 %v110
  %v493 = vunpack.c.h.b16 %v110
  %v494 = vunpack.c.l.b16 %v111
  %v495 = vunpack.c.h.b16 %v111
  %v496 = vunpack.c.l.b16 %v112
  %v497 = vunpack.c.h.b16 %v112
  %v498 = vunpack.c.l.b16 %v113
  %v499 = vunpack.c.h.b16 %v113
  %v500 = vunpack.c.l.b16 %v114
  %v501 = vunpack.c.h.b16 %v114
  %v502 = vunpack.c.l.b16 %v115
  %v503 = vunpack.c.h.b16 %v115
  %v504 = vunpack.c.l.b16 %v116
  %v505 = vunpack.c.h.b16 %v116
  %v506 = vunpack.c.l.b16 %v117
  %v507 = vunpack.c.h.b16 %v117
  %v508 = vunpack.c.l.b16 %v118
  %v509 = vunpack.c.h.b16 %v118
  %v510 = vunpack.c.l.b16 %v119
  %v511 = vunpack.c.h.b16 %v119
  %v512 = vunpack.c.l.b16 %v120
  %v513 = vunpack.c.h.b16 %v120
  %v514 = vunpack.c.l.b16 %v121
  %v515 = vunpack.c.h.b16 %v121
  %v516 = vunpack.c.l.b16 %v122
  %v517 = vunpack.c.h.b16 %v122
  %v518 = vunpack.c.l.b16 %v123
  %v519 = vunpack.c.h.b16 %v123
  %v520 = vunpack.c.l.b16 %v124
  %v521 = vunpack.c.h.b16 %v124
  %v522 = vunpack.c.l.b16 %v125
  %v523 = vunpack.c.h.b16 %v125
  %v524 = vunpack.c.l.b16 %v126
  %v525 = vunpack.c.h.b16 %v126
  %v526 = vunpack.c.l.b16 %v127
  %v527 = vunpack.c.h.b16 %v127
  %v528 = vunpack.c.l.b16 %v128
  %v529 = vunpack.c.h.b16 %v128
  %v530 = vunpack.c.l.b16 %v129
  %v531 = vunpack.c.h.b16 %v129
  %v532 = vunpack.c.l.b16 %v130
  %v533 = vunpack.c.h.b16 %v130
  %v534 = vunpack.c.l.b16 %v131
  %v535 = vunpack.c.h.b16 %v131
  %v536 = vunpack.c.l.b16 %v132
  %v537 = vunpack.c.h.b16 %v132
  %v538 = vunpack.c.l.b16 %v133
  %v539 = vunpack.c.h.b16 %v133
  %v540 = vunpack.c.l.b16 %v134
  %v541 = vunpack.c.h.b16 %v134
  %v542 = vunpack.c.l.b16 %v135
  %v543 = vunpack.c.h.b16 %v135
  %v544 = vunpack.c.l.b16 %v136
  %v545 = vunpack.c.h.b16 %v136
  %v546 = vunpack.c.l.b16 %v137
  %v547 = vunpack.c.h.b16 %v137
  %v548 = vunpack.c.l.b16 %v138
  %v549 = vunpack.c.h.b16 %v138
  %v550 = vunpack.c.l.b16 %v139
  %v551 = vunpack.c.h.b16 %v139
  %v552 = vunpack.c.l.b16 %v140
  %v553 = vunpack.c.h.b16 %v140
  %v554 = vunpack.c.l.b16 %v141
  %v555 = vunpack.c.h.b16 %v141
  %v556 = vunpack.c.l.b16 %v142
  %v557 = vunpack.c.h.b16 %v142
  %v558 = vunpack.c.l.b16 %v143
  %v559 = vunpack.c.h.b16 %v143
  %v560 = vunpack.c.l.b16 %v144
  %v561 = vunpack.c.h.b16 %v144
  %v562 = vunpack.c.l.b16 %v145
  %v563 = vunpack.c.h.b16 %v145
  %v564 = vunpack.c.l.b16 %v146
  %v565 = vunpack.c.h.b16 %v146
  %v566 = vunpack.c.l.b16 %v147
  %v567 = vunpack.c.h.b16 %v147
  %v568 = vunpack.c.l.b16 %v148
  %v569 = vunpack.c.h.b16 %v148
  %v570 = vunpack.c.l.b16 %v149
  %v571 = vunpack.c.h.b16 %v149
  %v572 = vunpack.c.l.b16 %v150
  %v573 = vunpack.c.h.b16 %v150
  %v574 = vunpack.c.l.b16 %v151
  %v575 = vunpack.c.h.b16 %v151
  %v576 = vunpack.c.l.b16 %v152
  %v577 = vunpack.c.h.b16 %v152
  %v578 = vunpack.c.l.b16 %v153
  %v579 = vunpack.c.h.b16 %v153
  %v580 = vunpack.c.l.b16 %v154
  %v581 = vunpack.c.h.b16 %v154
  %v582 = vunpack.c.l.b16 %v155
  %v583 = vunpack.c.h.b16 %v155
  %v584 = vunpack.c.l.b16 %v156
  %v585 = vunpack.c.h.b16 %v156
  %v586 = vunpack.c.l.b16 %v157
  %v587 = vunpack.c.h.b16 %v157
  %v588 = vunpack.c.l.b16 %v158
  %v589 = vunpack.c.h.b16 %v158
  %v590 = vunpack.c.l.b16 %v159
  %v591 = vunpack.c.h.b16 %v159
  %v592 = vunpack.c.l.b16 %v160
  %v593 = vunpack.c.h.b16 %v160
  %v594 = vunpack.c.l.b16 %v161
  %v595 = vunpack.c.h.b16 %v161
  %v596 = vunpack.c.l.b16 %v162
  %v597 = vunpack.c.h.b16 %v162
  %v598 = vunpack.c.l.b16 %v163
  %v599 = vunpack.c.h.b16 %v163
  %v600 = vpack.c.b16 %v352, %v344
  %v601 = vpack.c.b16 %v353, %v345
  %v602 = vpack.c.b16 %v354, %v346
  %v603 = vpack.c.b16 %v355, %v347
  %v604 = vpack.c.b16 %v356, %v348
  %v605 = vpack.c.b16 %v357, %v349
  %v606 = vpack.c.b16 %v358, %v350
  %v607 = vpack.c.b16 %v359, %v351
  %v608 = vpack.c.b16 %v368, %v360
  %v609 = vpack.c.b16 %v369, %v361
  %v610 = vpack.c.b16 %v370, %v362
  %v611 = vpack.c.b16 %v371, %v363
  %v612 = vpack.c.b16 %v372, %v364
  %v613 = vpack.c.b16 %v373, %v365
  %v614 = vpack.c.b16 %v374, %v366
  %v615 = vpack.c.b16 %v375, %v367
  %v616 = vpack.c.b16 %v384, %v376
  %v617 = vpack.c.b16 %v385, %v377
  %v618 = vpack.c.b16 %v386, %v378
  %v619 = vpack.c.b16 %v387, %v379
  %v620 = vpack.c.b16 %v388, %v380
  %v621 = vpack.c.b16 %v389, %v381
  %v622 = vpack.c.b16 %v390, %v382
  %v623 = vpack.c.b16 %v391, %v383
  %v624 = vpack.c.b16 %v400, %v392
  %v625 = vpack.c.b16 %v401, %v393
  %v626 = vpack.c.b16 %v402, %v394
  %v627 = vpack.c.b16 %v403, %v395
  %v628 = vpack.c.b16 %v404, %v396
  %v629 = vpack.c.b16 %v405, %v397
  %v630 = vpack.c.b16 %v406, %v398
  %v631 = vpack.c.b16 %v407, %v399
  %v632 = vpack.c.b16 %v416, %v408
  %v633 = vpack.c.b16 %v417, %v409
  %v634 = vpack.c.b16 %v418, %v410
  %v635 = vpack.c.b16 %v419, %v411
  %v636 = vpack.c.b16 %v420, %v412
  %v637 = vpack.c.b16 %v421, %v413
  %v638 = vpack.c.b16 %v422, %v414
  %v639 = vpack.c.b16 %v423, %v415
  %v640 = vpack.c.b16 %v432, %v424
  %v641 = vpack.c.b16 %v433, %v425
  %v642 = vpack.c.b16 %v434, %v426
  %v643 = vpack.c.b16 %v435, %v427
  %v644 = vpack.c.b16 %v436, %v428
  %v645 = vpack.c.b16 %v437, %v429
  %v646 = vpack.c.b16 %v438, %v430
  %v647 = vpack.c.b16 %v439, %v431
  %v648 = vpack.c.b16 %v448, %v440
  %v649 = vpack.c.b16 %v449, %v441
  %v650 = vpack.c.b16 %v450, %v442
  %v651 = vpack.c.b16 %v451, %v443
  %v652 = vpack.c.b16 %v452, %v444
  %v653 = vpack.c.b16 %v453, %v445
  %v654 = vpack.c.b16 %v454, %v446
  %v655 = vpack.c.b16 %v455, %v447
  %v656 = vpack.c.b16 %v464, %v456
  %v657 = vpack.c.b16 %v465, %v457
  %v658 = vpack.c.b16 %v466, %v458
  %v659 = vpack.c.b16 %v467, %v459
  %v660 = vpack.c.b16 %v468, %v460
  %v661 = vpack.c.b16 %v469, %v461
  %v662 = vpack.c.b16 %v470, %v462
  %v663 = vpack.c.b16 %v471, %v463
  %v664 = vpack.c.b16 %v480, %v472
  %v665 = vpack.c.b16 %v481, %v473
  %v666 = vpack.c.b16 %v482, %v474
  %v667 = vpack.c.b16 %v483, %v475
  %v668 = vpack.c.b16 %v484, %v476
  %v669 = vpack.c.b16 %v485, %v477
  %v670 = vpack.c.b16 %v486, %v478
  %v671 = vpack.c.b16 %v487, %v479
  %v672 = vpack.c.b16 %v496, %v488
  %v673 = vpack.c.b16 %v497, %v489
  %v674 = vpack.c.b16 %v498, %v490
  %v675 = vpack.c.b16 %v499, %v491
  %v676 = vpack.c.b16 %v500, %v492
  %v677 = vpack.c.b16 %v501, %v493
  %v678 = vpack.c.b16 %v502, %v494
  %v679 = vpack.c.b16 %v503, %v495
  %v680 = vpack.c.b16 %v512, %v504
  %v681 = vpack.c.b16 %v513, %v505
  %v682 = vpack.c.b16 %v514, %v506
  %v683 = vpack.c.b16 %v515, %v507
  %v684 = vpack.c.b16 %v516, %v508
  %v685 = vpack.c.b16 %v517, %v509
  %v686 = vpack.c.b16 %v518, %v510
  %v687 = vpack.c.b16 %v519, %v511
  %v688 = vpack.c.b16 %v528, %v520
  %v689 = vpack.c.b16 %v529, %v521
  %v690 = vpack.c.b16 %v530, %v522
  %v691 = vpack.c.b16 %v531, %v523
  %v692 = vpack.c.b16 %v532, %v524
  %v693 = vpack.c.b16 %v533, %v525
  %v694 = vpack.c.b16 %v534, %v526
  %v695 = vpack.c.b16 %v535, %v527
  %v696 = vpack.c.b16 %v544, %v536
  %v697 = vpack.c.b16 %v545, %v537
  %v698 = vpack.c.b16 %v546, %v538
  %v699 = vpack.c.b16 %v547, %v539
  %v700 = vpack.c.b16 %v548, %v540
  %v701 = vpack.c.b16 %v549, %v541
  %v702 = vpack.c.b16 %v550, %v542
  %v703 = vpack.c.b16 %v551, %v543
  %v704 = vpack.c.b16 %v560, %v552
  %v705 = vpack.c.b16 %v561, %v553
  %v706 = vpack.c.b16 %v562, %v554
  %v707 = vpack.c.b16 %v563, %v555
  %v708 = vpack.c.b16 %v564, %v556
  %v709 = vpack.c.b16 %v565, %v557
  %v710 = vpack.c.b16 %v566, %v558
  %v711 = vpack.c.b16 %v567, %v559
  %v712 = vpack.c.b16 %v576, %v568
  %v713 = vpack.c.b16 %v577, %v569
  %v714 = vpack.c.b16 %v578, %v570
  %v715 = vpack.c.b16 %v579, %v571
  %v716 = vpack.c.b16 %v580, %v572
  %v717 = vpack.c.b16 %v581, %v573
  %v718 = vpack.c.b16 %v582, %v574
  %v719 = vpack.c.b16 %v583, %v575
  %v720 = vpack.c.b16 %v592, %v584
  %v721 = vpack.c.b16 %v593, %v585
  %v722 = vpack.c.b16 %v594, %v586
  %v723 = vpack.c.b16 %v595, %v587
  %v724 = vpack.c.b16 %v596, %v588
  %v725 = vpack.c.b16 %v597, %v589
  %v726 = vpack.c.b16 %v598, %v590
  %v727 = vpack.c.b16 %v599, %v591
  %856 = vmatprep.subr.bf16.mxu0 %v601
  %857 = vmatpush1.bf16.msra.mxu0 %v600
  %858 = vmatprep.subr.bf16.mxu0 %v609
  %859 = vmatpush1.bf16.msra.mxu0 %v608
  %860 = vmatprep.subr.bf16.mxu0 %v617
  %861 = vmatpush1.bf16.msra.mxu0 %v616
  %862 = vmatprep.subr.bf16.mxu0 %v625
  %863 = vmatpush1.bf16.msra.mxu0 %v624
  %864 = vmatprep.subr.bf16.mxu0 %v633
  %865 = vmatpush1.bf16.msra.mxu0 %v632
  %866 = vmatprep.subr.bf16.mxu0 %v641
  %867 = vmatpush1.bf16.msra.mxu0 %v640
  %868 = vmatprep.subr.bf16.mxu0 %v649
  %869 = vmatpush1.bf16.msra.mxu0 %v648
  %870 = vmatprep.subr.bf16.mxu0 %v657
  %871 = vmatpush1.bf16.msra.mxu0 %v656
  %872 = vmatprep.subr.bf16.mxu0 %v665
  %873 = vmatpush1.bf16.msra.mxu0 %v664
  %874 = vmatprep.subr.bf16.mxu0 %v673
  %875 = vmatpush1.bf16.msra.mxu0 %v672
  %876 = vmatprep.subr.bf16.mxu0 %v681
  %877 = vmatpush1.bf16.msra.mxu0 %v680
  %878 = vmatprep.subr.bf16.mxu0 %v689
  %879 = vmatpush1.bf16.msra.mxu0 %v688
  %880 = vmatprep.subr.bf16.mxu0 %v697
  %881 = vmatpush1.bf16.msra.mxu0 %v696
  %882 = vmatprep.subr.bf16.mxu0 %v705
  %883 = vmatpush1.bf16.msra.mxu0 %v704
  %884 = vmatprep.subr.bf16.mxu0 %v713
  %885 = vmatpush1.bf16.msra.mxu0 %v712
  %886 = vmatprep.subr.bf16.mxu0 %v721
  %887 = vmatpush1.bf16.msra.mxu0 %v720
  %888 = vmatprep.mubr.bf16.mxu0 %v213
  %889 = vmatmul.mubr.bf16.gmra.mrb[0].mxu0 %v212
  %v890 = vpop.f32.mrb[0].mxu0
  %v891 = vadd.f32 %v169, %v890
  %v892 = vpop.f32.mrb[0].mxu0
  %v893 = vadd.f32 %v173, %v892
  %v894 = vpop.f32.mrb[0].mxu0
  %v895 = vadd.f32 %v169, %v894
  %v896 = vpop.f32.mrb[0].mxu0
  %v897 = vadd.f32 %v173, %v896
  %898 = vdwg.mxu0
  %899 = vmatprep.subr.bf16.mxu0 %v603
  %900 = vmatpush1.bf16.msra.mxu0 %v602
  %901 = vmatprep.subr.bf16.mxu0 %v611
  %902 = vmatpush1.bf16.msra.mxu0 %v610
  %903 = vmatprep.subr.bf16.mxu0 %v619
  %904 = vmatpush1.bf16.msra.mxu0 %v618
  %905 = vmatprep.subr.bf16.mxu0 %v627
  %906 = vmatpush1.bf16.msra.mxu0 %v626
  %907 = vmatprep.subr.bf16.mxu0 %v635
  %908 = vmatpush1.bf16.msra.mxu0 %v634
  %909 = vmatprep.subr.bf16.mxu0 %v643
  %910 = vmatpush1.bf16.msra.mxu0 %v642
  %911 = vmatprep.subr.bf16.mxu0 %v651
  %912 = vmatpush1.bf16.msra.mxu0 %v650
  %913 = vmatprep.subr.bf16.mxu0 %v659
  %914 = vmatpush1.bf16.msra.mxu0 %v658
  %915 = vmatprep.subr.bf16.mxu0 %v667
  %916 = vmatpush1.bf16.msra.mxu0 %v666
  %917 = vmatprep.subr.bf16.mxu0 %v675
  %918 = vmatpush1.bf16.msra.mxu0 %v674
  %919 = vmatprep.subr.bf16.mxu0 %v683
  %920 = vmatpush1.bf16.msra.mxu0 %v682
  %921 = vmatprep.subr.bf16.mxu0 %v691
  %922 = vmatpush1.bf16.msra.mxu0 %v690
  %923 = vmatprep.subr.bf16.mxu0 %v699
  %924 = vmatpush1.bf16.msra.mxu0 %v698
  %925 = vmatprep.subr.bf16.mxu0 %v707
  %926 = vmatpush1.bf16.msra.mxu0 %v706
  %927 = vmatprep.subr.bf16.mxu0 %v715
  %928 = vmatpush1.bf16.msra.mxu0 %v714
  %929 = vmatprep.subr.bf16.mxu0 %v723
  %930 = vmatpush1.bf16.msra.mxu0 %v722
  %931 = vmatprep.mubr.bf16.mxu0 %v213
  %932 = vmatmul.mubr.bf16.gmra.mrb[0].mxu0 %v212
  %v933 = vpop.f32.mrb[0].mxu0
  %v934 = vadd.f32 %v177, %v933
  %v935 = vpop.f32.mrb[0].mxu0
  %v936 = vadd.f32 %v181, %v935
  %v937 = vpop.f32.mrb[0].mxu0
  %v938 = vadd.f32 %v177, %v937
  %v939 = vpop.f32.mrb[0].mxu0
  %v940 = vadd.f32 %v181, %v939
  %941 = vdwg.mxu0
  %942 = vmatprep.subr.bf16.mxu0 %v605
  %943 = vmatpush1.bf16.msra.mxu0 %v604
  %944 = vmatprep.subr.bf16.mxu0 %v613
  %945 = vmatpush1.bf16.msra.mxu0 %v612
  %946 = vmatprep.subr.bf16.mxu0 %v621
  %947 = vmatpush1.bf16.msra.mxu0 %v620
  %948 = vmatprep.subr.bf16.mxu0 %v629
  %949 = vmatpush1.bf16.msra.mxu0 %v628
  %950 = vmatprep.subr.bf16.mxu0 %v637
  %951 = vmatpush1.bf16.msra.mxu0 %v636
  %952 = vmatprep.subr.bf16.mxu0 %v645
  %953 = vmatpush1.bf16.msra.mxu0 %v644
  %954 = vmatprep.subr.bf16.mxu0 %v653
  %955 = vmatpush1.bf16.msra.mxu0 %v652
  %956 = vmatprep.subr.bf16.mxu0 %v661
  %957 = vmatpush1.bf16.msra.mxu0 %v660
  %958 = vmatprep.subr.bf16.mxu0 %v669
  %959 = vmatpush1.bf16.msra.mxu0 %v668
  %960 = vmatprep.subr.bf16.mxu0 %v677
  %961 = vmatpush1.bf16.msra.mxu0 %v676
  %962 = vmatprep.subr.bf16.mxu0 %v685
  %963 = vmatpush1.bf16.msra.mxu0 %v684
  %964 = vmatprep.subr.bf16.mxu0 %v693
  %965 = vmatpush1.bf16.msra.mxu0 %v692
  %966 = vmatprep.subr.bf16.mxu0 %v701
  %967 = vmatpush1.bf16.msra.mxu0 %v700
  %968 = vmatprep.subr.bf16.mxu0 %v709
  %969 = vmatpush1.bf16.msra.mxu0 %v708
  %970 = vmatprep.subr.bf16.mxu0 %v717
  %971 = vmatpush1.bf16.msra.mxu0 %v716
  %972 = vmatprep.subr.bf16.mxu0 %v725
  %973 = vmatpush1.bf16.msra.mxu0 %v724
  %974 = vmatprep.mubr.bf16.mxu0 %v213
  %975 = vmatmul.mubr.bf16.gmra.mrb[0].mxu0 %v212
  %v976 = vpop.f32.mrb[0].mxu0
  %v977 = vadd.f32 %v185, %v976
  %v978 = vpop.f32.mrb[0].mxu0
  %v979 = vadd.f32 %v189, %v978
  %v980 = vpop.f32.mrb[0].mxu0
  %v981 = vadd.f32 %v185, %v980
  %v982 = vpop.f32.mrb[0].mxu0
  %v983 = vadd.f32 %v189, %v982
  %984 = vdwg.mxu0
  %985 = vmatprep.subr.bf16.mxu0 %v607
  %986 = vmatpush1.bf16.msra.mxu0 %v606
  %987 = vmatprep.subr.bf16.mxu0 %v615
  %988 = vmatpush1.bf16.msra.mxu0 %v614
  %989 = vmatprep.subr.bf16.mxu0 %v623
  %990 = vmatpush1.bf16.msra.mxu0 %v622
  %991 = vmatprep.subr.bf16.mxu0 %v631
  %992 = vmatpush1.bf16.msra.mxu0 %v630
  %993 = vmatprep.subr.bf16.mxu0 %v639
  %994 = vmatpush1.bf16.msra.mxu0 %v638
  %995 = vmatprep.subr.bf16.mxu0 %v647
  %996 = vmatpush1.bf16.msra.mxu0 %v646
  %997 = vmatprep.subr.bf16.mxu0 %v655
  %998 = vmatpush1.bf16.msra.mxu0 %v654
  %999 = vmatprep.subr.bf16.mxu0 %v663
  %1000 = vmatpush1.bf16.msra.mxu0 %v662
  %1001 = vmatprep.subr.bf16.mxu0 %v671
  %1002 = vmatpush1.bf16.msra.mxu0 %v670
  %1003 = vmatprep.subr.bf16.mxu0 %v679
  %1004 = vmatpush1.bf16.msra.mxu0 %v678
  %1005 = vmatprep.subr.bf16.mxu0 %v687
  %1006 = vmatpush1.bf16.msra.mxu0 %v686
  %1007 = vmatprep.subr.bf16.mxu0 %v695
  %1008 = vmatpush1.bf16.msra.mxu0 %v694
  %1009 = vmatprep.subr.bf16.mxu0 %v703
  %1010 = vmatpush1.bf16.msra.mxu0 %v702
  %1011 = vmatprep.subr.bf16.mxu0 %v711
  %1012 = vmatpush1.bf16.msra.mxu0 %v710
  %1013 = vmatprep.subr.bf16.mxu0 %v719
  %1014 = vmatpush1.bf16.msra.mxu0 %v718
  %1015 = vmatprep.subr.bf16.mxu0 %v727
  %1016 = vmatpush1.bf16.msra.mxu0 %v726
  %1017 = vmatprep.mubr.bf16.mxu0 %v213
  %1018 = vmatmul.mubr.bf16.gmra.mrb[0].mxu0 %v212
  %v1019 = vpop.f32.mrb[0].mxu0
  %v1020 = vadd.f32 %v193, %v1019
  %v1021 = vpop.f32.mrb[0].mxu0
  %v1022 = vadd.f32 %v197, %v1021
  %v1023 = vpop.f32.mrb[0].mxu0
  %v1024 = vadd.f32 %v193, %v1023
  %v1025 = vpop.f32.mrb[0].mxu0
  %v1026 = vadd.f32 %v197, %v1025
  %1027 = vdwg.mxu0
  %v1028 = vmul.f32 %v891, 0.01
  %v1029 = vmul.f32 %v893, 0.01
  %v1030 = vmul.f32 %v934, 0.01
  %v1031 = vmul.f32 %v936, 0.01
  %v1032 = vmul.f32 %v977, 0.01
  %v1033 = vmul.f32 %v979, 0.01
  %v1034 = vmul.f32 %v1020, 0.01
  %v1035 = vmul.f32 %v1022, 0.01
  %v1036 = vmul.f32 %v895, 0.01
  %v1037 = vmul.f32 %v897, 0.01
  %v1038 = vmul.f32 %v938, 0.01
  %v1039 = vmul.f32 %v940, 0.01
  %v1040 = vmul.f32 %v981, 0.01
  %v1041 = vmul.f32 %v983, 0.01
  %v1042 = vmul.f32 %v1024, 0.01
  %v1043 = vmul.f32 %v1026, 0.01
  %v1044 = vmax.f32 %v891, %v1028
  %v1045 = vmax.f32 %v893, %v1029
  %v1046 = vmax.f32 %v934, %v1030
  %v1047 = vmax.f32 %v936, %v1031
  %v1048 = vmax.f32 %v977, %v1032
  %v1049 = vmax.f32 %v979, %v1033
  %v1050 = vmax.f32 %v1020, %v1034
  %v1051 = vmax.f32 %v1022, %v1035
  %v1052 = vmax.f32 %v895, %v1036
  %v1053 = vmax.f32 %v897, %v1037
  %v1054 = vmax.f32 %v938, %v1038
  %v1055 = vmax.f32 %v940, %v1039
  %v1056 = vmax.f32 %v981, %v1040
  %v1057 = vmax.f32 %v983, %v1041
  %v1058 = vmax.f32 %v1024, %v1042
  %v1059 = vmax.f32 %v1026, %v1043
  %v1060 = vpack.c.bf16 %v1052, %v1044
  %v1061 = vpack.c.bf16 %v1053, %v1045
  %v1062 = vpack.c.bf16 %v1054, %v1046
  %v1063 = vpack.c.bf16 %v1055, %v1047
  %v1064 = vpack.c.bf16 %v1056, %v1048
  %v1065 = vpack.c.bf16 %v1057, %v1049
  %v1066 = vpack.c.bf16 %v1058, %v1050
  %v1067 = vpack.c.bf16 %v1059, %v1051
  %v1068 = vld [vmem:[%s3] sm:$0xff]
  %v1069 = vld [vmem:[%s3 + $0x8] sm:$0xff]
  %v1070 = vld [vmem:[%s3 + $0x10] sm:$0xff]
  %v1071 = vld [vmem:[%s3 + $0x18] sm:$0xff]
  %v1072 = vld [vmem:[%s3 + $0x20] sm:$0xff]
  %v1073 = vld [vmem:[%s3 + $0x28] sm:$0xff]
  %v1074 = vld [vmem:[%s3 + $0x30] sm:$0xff]
  %v1075 = vld [vmem:[%s3 + $0x38] sm:$0xff]
  %v1076 = vld [vmem:[%s3 + $0x40] sm:$0xff]
  %v1077 = vld [vmem:[%s3 + $0x48] sm:$0xff]
  %v1078 = vld [vmem:[%s3 + $0x50] sm:$0xff]
  %v1079 = vld [vmem:[%s3 + $0x58] sm:$0xff]
  %v1080 = vld [vmem:[%s3 + $0x60] sm:$0xff]
  %v1081 = vld [vmem:[%s3 + $0x68] sm:$0xff]
  %v1082 = vld [vmem:[%s3 + $0x70] sm:$0xff]
  %v1083 = vld [vmem:[%s3 + $0x78] sm:$0xff]
  %v1084 = vld [vmem:[%s3 + $0x80] sm:$0xff]
  %v1085 = vld [vmem:[%s3 + $0x88] sm:$0xff]
  %v1086 = vld [vmem:[%s3 + $0x90] sm:$0xff]
  %v1087 = vld [vmem:[%s3 + $0x98] sm:$0xff]
  %v1088 = vld [vmem:[%s3 + $0xa0] sm:$0xff]
  %v1089 = vld [vmem:[%s3 + $0xa8] sm:$0xff]
  %v1090 = vld [vmem:[%s3 + $0xb0] sm:$0xff]
  %v1091 = vld [vmem:[%s3 + $0xb8] sm:$0xff]
  %v1092 = vld [vmem:[%s3 + $0xc0] sm:$0xff]
  %v1093 = vld [vmem:[%s3 + $0xc8] sm:$0xff]
  %v1094 = vld [vmem:[%s3 + $0xd0] sm:$0xff]
  %v1095 = vld [vmem:[%s3 + $0xd8] sm:$0xff]
  %v1096 = vld [vmem:[%s3 + $0xe0] sm:$0xff]
  %v1097 = vld [vmem:[%s3 + $0xe8] sm:$0xff]
  %v1098 = vld [vmem:[%s3 + $0xf0] sm:$0xff]
  %v1099 = vld [vmem:[%s3 + $0xf8] sm:$0xff]
  %v1100 = vld [vmem:[%s3 + $0x100] sm:$0xff]
  %v1101 = vld [vmem:[%s3 + $0x108] sm:$0xff]
  %v1102 = vld [vmem:[%s3 + $0x110] sm:$0xff]
  %v1103 = vld [vmem:[%s3 + $0x118] sm:$0xff]
  %v1104 = vld [vmem:[%s3 + $0x120] sm:$0xff]
  %v1105 = vld [vmem:[%s3 + $0x128] sm:$0xff]
  %v1106 = vld [vmem:[%s3 + $0x130] sm:$0xff]
  %v1107 = vld [vmem:[%s3 + $0x138] sm:$0xff]
  %v1108 = vld [vmem:[%s3 + $0x140] sm:$0xff]
  %v1109 = vld [vmem:[%s3 + $0x148] sm:$0xff]
  %v1110 = vld [vmem:[%s3 + $0x150] sm:$0xff]
  %v1111 = vld [vmem:[%s3 + $0x158] sm:$0xff]
  %v1112 = vld [vmem:[%s3 + $0x160] sm:$0xff]
  %v1113 = vld [vmem:[%s3 + $0x168] sm:$0xff]
  %v1114 = vld [vmem:[%s3 + $0x170] sm:$0xff]
  %v1115 = vld [vmem:[%s3 + $0x178] sm:$0xff]
  %v1116 = vld [vmem:[%s3 + $0x180] sm:$0xff]
  %v1117 = vld [vmem:[%s3 + $0x188] sm:$0xff]
  %v1118 = vld [vmem:[%s3 + $0x190] sm:$0xff]
  %v1119 = vld [vmem:[%s3 + $0x198] sm:$0xff]
  %v1120 = vld [vmem:[%s3 + $0x1a0] sm:$0xff]
  %v1121 = vld [vmem:[%s3 + $0x1a8] sm:$0xff]
  %v1122 = vld [vmem:[%s3 + $0x1b0] sm:$0xff]
  %v1123 = vld [vmem:[%s3 + $0x1b8] sm:$0xff]
  %v1124 = vld [vmem:[%s3 + $0x1c0] sm:$0xff]
  %v1125 = vld [vmem:[%s3 + $0x1c8] sm:$0xff]
  %v1126 = vld [vmem:[%s3 + $0x1d0] sm:$0xff]
  %v1127 = vld [vmem:[%s3 + $0x1d8] sm:$0xff]
  %v1128 = vld [vmem:[%s3 + $0x1e0] sm:$0xff]
  %v1129 = vld [vmem:[%s3 + $0x1e8] sm:$0xff]
  %v1130 = vld [vmem:[%s3 + $0x1f0] sm:$0xff]
  %v1131 = vld [vmem:[%s3 + $0x1f8] sm:$0xff]
  %v1132 = vld [vmem:[%s3 + $0x200] sm:$0xff]
  %v1133 = vld [vmem:[%s3 + $0x208] sm:$0xff]
  %v1134 = vld [vmem:[%s3 + $0x210] sm:$0xff]
  %v1135 = vld [vmem:[%s3 + $0x218] sm:$0xff]
  %v1136 = vld [vmem:[%s3 + $0x220] sm:$0xff]
  %v1137 = vld [vmem:[%s3 + $0x228] sm:$0xff]
  %v1138 = vld [vmem:[%s3 + $0x230] sm:$0xff]
  %v1139 = vld [vmem:[%s3 + $0x238] sm:$0xff]
  %v1140 = vld [vmem:[%s3 + $0x240] sm:$0xff]
  %v1141 = vld [vmem:[%s3 + $0x248] sm:$0xff]
  %v1142 = vld [vmem:[%s3 + $0x250] sm:$0xff]
  %v1143 = vld [vmem:[%s3 + $0x258] sm:$0xff]
  %v1144 = vld [vmem:[%s3 + $0x260] sm:$0xff]
  %v1145 = vld [vmem:[%s3 + $0x268] sm:$0xff]
  %v1146 = vld [vmem:[%s3 + $0x270] sm:$0xff]
  %v1147 = vld [vmem:[%s3 + $0x278] sm:$0xff]
  %v1148 = vld [vmem:[%s3 + $0x280] sm:$0xff]
  %v1149 = vld [vmem:[%s3 + $0x288] sm:$0xff]
  %v1150 = vld [vmem:[%s3 + $0x290] sm:$0xff]
  %v1151 = vld [vmem:[%s3 + $0x298] sm:$0xff]
  %v1152 = vld [vmem:[%s3 + $0x2a0] sm:$0xff]
  %v1153 = vld [vmem:[%s3 + $0x2a8] sm:$0xff]
  %v1154 = vld [vmem:[%s3 + $0x2b0] sm:$0xff]
  %v1155 = vld [vmem:[%s3 + $0x2b8] sm:$0xff]
  %v1156 = vld [vmem:[%s3 + $0x2c0] sm:$0xff]
  %v1157 = vld [vmem:[%s3 + $0x2c8] sm:$0xff]
  %v1158 = vld [vmem:[%s3 + $0x2d0] sm:$0xff]
  %v1159 = vld [vmem:[%s3 + $0x2d8] sm:$0xff]
  %v1160 = vld [vmem:[%s3 + $0x2e0] sm:$0xff]
  %v1161 = vld [vmem:[%s3 + $0x2e8] sm:$0xff]
  %v1162 = vld [vmem:[%s3 + $0x2f0] sm:$0xff]
  %v1163 = vld [vmem:[%s3 + $0x2f8] sm:$0xff]
  %v1164 = vld [vmem:[%s3 + $0x300] sm:$0xff]
  %v1165 = vld [vmem:[%s3 + $0x308] sm:$0xff]
  %v1166 = vld [vmem:[%s3 + $0x310] sm:$0xff]
  %v1167 = vld [vmem:[%s3 + $0x318] sm:$0xff]
  %v1168 = vld [vmem:[%s3 + $0x320] sm:$0xff]
  %v1169 = vld [vmem:[%s3 + $0x328] sm:$0xff]
  %v1170 = vld [vmem:[%s3 + $0x330] sm:$0xff]
  %v1171 = vld [vmem:[%s3 + $0x338] sm:$0xff]
  %v1172 = vld [vmem:[%s3 + $0x340] sm:$0xff]
  %v1173 = vld [vmem:[%s3 + $0x348] sm:$0xff]
  %v1174 = vld [vmem:[%s3 + $0x350] sm:$0xff]
  %v1175 = vld [vmem:[%s3 + $0x358] sm:$0xff]
  %v1176 = vld [vmem:[%s3 + $0x360] sm:$0xff]
  %v1177 = vld [vmem:[%s3 + $0x368] sm:$0xff]
  %v1178 = vld [vmem:[%s3 + $0x370] sm:$0xff]
  %v1179 = vld [vmem:[%s3 + $0x378] sm:$0xff]
  %v1180 = vld [vmem:[%s3 + $0x380] sm:$0xff]
  %v1181 = vld [vmem:[%s3 + $0x388] sm:$0xff]
  %v1182 = vld [vmem:[%s3 + $0x390] sm:$0xff]
  %v1183 = vld [vmem:[%s3 + $0x398] sm:$0xff]
  %v1184 = vld [vmem:[%s3 + $0x3a0] sm:$0xff]
  %v1185 = vld [vmem:[%s3 + $0x3a8] sm:$0xff]
  %v1186 = vld [vmem:[%s3 + $0x3b0] sm:$0xff]
  %v1187 = vld [vmem:[%s3 + $0x3b8] sm:$0xff]
  %v1188 = vld [vmem:[%s3 + $0x3c0] sm:$0xff]
  %v1189 = vld [vmem:[%s3 + $0x3c8] sm:$0xff]
  %v1190 = vld [vmem:[%s3 + $0x3d0] sm:$0xff]
  %v1191 = vld [vmem:[%s3 + $0x3d8] sm:$0xff]
  %v1192 = vld [vmem:[%s3 + $0x3e0] sm:$0xff]
  %v1193 = vld [vmem:[%s3 + $0x3e8] sm:$0xff]
  %v1194 = vld [vmem:[%s3 + $0x3f0] sm:$0xff]
  %v1195 = vld [vmem:[%s3 + $0x3f8] sm:$0xff]
  %v1196 = vld [vmem:[%s3 + $0x400] sm:$0xff]
  %v1197 = vld [vmem:[%s3 + $0x408] sm:$0xff]
  %v1198 = vld [vmem:[%s3 + $0x410] sm:$0xff]
  %v1199 = vld [vmem:[%s3 + $0x418] sm:$0xff]
  %v1200 = vld [vmem:[%s3 + $0x420] sm:$0xff]
  %v1201 = vld [vmem:[%s3 + $0x428] sm:$0xff]
  %v1202 = vld [vmem:[%s3 + $0x430] sm:$0xff]
  %v1203 = vld [vmem:[%s3 + $0x438] sm:$0xff]
  %v1204 = vld [vmem:[%s3 + $0x440] sm:$0xff]
  %v1205 = vld [vmem:[%s3 + $0x448] sm:$0xff]
  %v1206 = vld [vmem:[%s3 + $0x450] sm:$0xff]
  %v1207 = vld [vmem:[%s3 + $0x458] sm:$0xff]
  %v1208 = vld [vmem:[%s3 + $0x460] sm:$0xff]
  %v1209 = vld [vmem:[%s3 + $0x468] sm:$0xff]
  %v1210 = vld [vmem:[%s3 + $0x470] sm:$0xff]
  %v1211 = vld [vmem:[%s3 + $0x478] sm:$0xff]
  %v1212 = vld [vmem:[%s3 + $0x480] sm:$0xff]
  %v1213 = vld [vmem:[%s3 + $0x488] sm:$0xff]
  %v1214 = vld [vmem:[%s3 + $0x490] sm:$0xff]
  %v1215 = vld [vmem:[%s3 + $0x498] sm:$0xff]
  %v1216 = vld [vmem:[%s3 + $0x4a0] sm:$0xff]
  %v1217 = vld [vmem:[%s3 + $0x4a8] sm:$0xff]
  %v1218 = vld [vmem:[%s3 + $0x4b0] sm:$0xff]
  %v1219 = vld [vmem:[%s3 + $0x4b8] sm:$0xff]
  %v1220 = vld [vmem:[%s3 + $0x4c0] sm:$0xff]
  %v1221 = vld [vmem:[%s3 + $0x4c8] sm:$0xff]
  %v1222 = vld [vmem:[%s3 + $0x4d0] sm:$0xff]
  %v1223 = vld [vmem:[%s3 + $0x4d8] sm:$0xff]
  %v1224 = vld [vmem:[%s3 + $0x4e0] sm:$0xff]
  %v1225 = vld [vmem:[%s3 + $0x4e8] sm:$0xff]
  %v1226 = vld [vmem:[%s3 + $0x4f0] sm:$0xff]
  %v1227 = vld [vmem:[%s3 + $0x4f8] sm:$0xff]
  %v1228 = vld [vmem:[%s3 + $0x500] sm:$0xff]
  %v1229 = vld [vmem:[%s3 + $0x508] sm:$0xff]
  %v1230 = vld [vmem:[%s3 + $0x510] sm:$0xff]
  %v1231 = vld [vmem:[%s3 + $0x518] sm:$0xff]
  %v1232 = vld [vmem:[%s3 + $0x520] sm:$0xff]
  %v1233 = vld [vmem:[%s3 + $0x528] sm:$0xff]
  %v1234 = vld [vmem:[%s3 + $0x530] sm:$0xff]
  %v1235 = vld [vmem:[%s3 + $0x538] sm:$0xff]
  %v1236 = vld [vmem:[%s3 + $0x540] sm:$0xff]
  %v1237 = vld [vmem:[%s3 + $0x548] sm:$0xff]
  %v1238 = vld [vmem:[%s3 + $0x550] sm:$0xff]
  %v1239 = vld [vmem:[%s3 + $0x558] sm:$0xff]
  %v1240 = vld [vmem:[%s3 + $0x560] sm:$0xff]
  %v1241 = vld [vmem:[%s3 + $0x568] sm:$0xff]
  %v1242 = vld [vmem:[%s3 + $0x570] sm:$0xff]
  %v1243 = vld [vmem:[%s3 + $0x578] sm:$0xff]
  %v1244 = vld [vmem:[%s3 + $0x580] sm:$0xff]
  %v1245 = vld [vmem:[%s3 + $0x588] sm:$0xff]
  %v1246 = vld [vmem:[%s3 + $0x590] sm:$0xff]
  %v1247 = vld [vmem:[%s3 + $0x598] sm:$0xff]
  %v1248 = vld [vmem:[%s3 + $0x5a0] sm:$0xff]
  %v1249 = vld [vmem:[%s3 + $0x5a8] sm:$0xff]
  %v1250 = vld [vmem:[%s3 + $0x5b0] sm:$0xff]
  %v1251 = vld [vmem:[%s3 + $0x5b8] sm:$0xff]
  %v1252 = vld [vmem:[%s3 + $0x5c0] sm:$0xff]
  %v1253 = vld [vmem:[%s3 + $0x5c8] sm:$0xff]
  %v1254 = vld [vmem:[%s3 + $0x5d0] sm:$0xff]
  %v1255 = vld [vmem:[%s3 + $0x5d8] sm:$0xff]
  %v1256 = vld [vmem:[%s3 + $0x5e0] sm:$0xff]
  %v1257 = vld [vmem:[%s3 + $0x5e8] sm:$0xff]
  %v1258 = vld [vmem:[%s3 + $0x5f0] sm:$0xff]
  %v1259 = vld [vmem:[%s3 + $0x5f8] sm:$0xff]
  %v1260 = vld [vmem:[%s3 + $0x600] sm:$0xff]
  %v1261 = vld [vmem:[%s3 + $0x608] sm:$0xff]
  %v1262 = vld [vmem:[%s3 + $0x610] sm:$0xff]
  %v1263 = vld [vmem:[%s3 + $0x618] sm:$0xff]
  %v1264 = vld [vmem:[%s3 + $0x620] sm:$0xff]
  %v1265 = vld [vmem:[%s3 + $0x628] sm:$0xff]
  %v1266 = vld [vmem:[%s3 + $0x630] sm:$0xff]
  %v1267 = vld [vmem:[%s3 + $0x638] sm:$0xff]
  %v1268 = vld [vmem:[%s3 + $0x640] sm:$0xff]
  %v1269 = vld [vmem:[%s3 + $0x648] sm:$0xff]
  %v1270 = vld [vmem:[%s3 + $0x650] sm:$0xff]
  %v1271 = vld [vmem:[%s3 + $0x658] sm:$0xff]
  %v1272 = vld [vmem:[%s3 + $0x660] sm:$0xff]
  %v1273 = vld [vmem:[%s3 + $0x668] sm:$0xff]
  %v1274 = vld [vmem:[%s3 + $0x670] sm:$0xff]
  %v1275 = vld [vmem:[%s3 + $0x678] sm:$0xff]
  %v1276 = vld [vmem:[%s3 + $0x680] sm:$0xff]
  %v1277 = vld [vmem:[%s3 + $0x688] sm:$0xff]
  %v1278 = vld [vmem:[%s3 + $0x690] sm:$0xff]
  %v1279 = vld [vmem:[%s3 + $0x698] sm:$0xff]
  %v1280 = vld [vmem:[%s3 + $0x6a0] sm:$0xff]
  %v1281 = vld [vmem:[%s3 + $0x6a8] sm:$0xff]
  %v1282 = vld [vmem:[%s3 + $0x6b0] sm:$0xff]
  %v1283 = vld [vmem:[%s3 + $0x6b8] sm:$0xff]
  %v1284 = vld [vmem:[%s3 + $0x6c0] sm:$0xff]
  %v1285 = vld [vmem:[%s3 + $0x6c8] sm:$0xff]
  %v1286 = vld [vmem:[%s3 + $0x6d0] sm:$0xff]
  %v1287 = vld [vmem:[%s3 + $0x6d8] sm:$0xff]
  %v1288 = vld [vmem:[%s3 + $0x6e0] sm:$0xff]
  %v1289 = vld [vmem:[%s3 + $0x6e8] sm:$0xff]
  %v1290 = vld [vmem:[%s3 + $0x6f0] sm:$0xff]
  %v1291 = vld [vmem:[%s3 + $0x6f8] sm:$0xff]
  %v1292 = vld [vmem:[%s3 + $0x700] sm:$0xff]
  %v1293 = vld [vmem:[%s3 + $0x708] sm:$0xff]
  %v1294 = vld [vmem:[%s3 + $0x710] sm:$0xff]
  %v1295 = vld [vmem:[%s3 + $0x718] sm:$0xff]
  %v1296 = vld [vmem:[%s3 + $0x720] sm:$0xff]
  %v1297 = vld [vmem:[%s3 + $0x728] sm:$0xff]
  %v1298 = vld [vmem:[%s3 + $0x730] sm:$0xff]
  %v1299 = vld [vmem:[%s3 + $0x738] sm:$0xff]
  %v1300 = vld [vmem:[%s3 + $0x740] sm:$0xff]
  %v1301 = vld [vmem:[%s3 + $0x748] sm:$0xff]
  %v1302 = vld [vmem:[%s3 + $0x750] sm:$0xff]
  %v1303 = vld [vmem:[%s3 + $0x758] sm:$0xff]
  %v1304 = vld [vmem:[%s3 + $0x760] sm:$0xff]
  %v1305 = vld [vmem:[%s3 + $0x768] sm:$0xff]
  %v1306 = vld [vmem:[%s3 + $0x770] sm:$0xff]
  %v1307 = vld [vmem:[%s3 + $0x778] sm:$0xff]
  %v1308 = vld [vmem:[%s3 + $0x780] sm:$0xff]
  %v1309 = vld [vmem:[%s3 + $0x788] sm:$0xff]
  %v1310 = vld [vmem:[%s3 + $0x790] sm:$0xff]
  %v1311 = vld [vmem:[%s3 + $0x798] sm:$0xff]
  %v1312 = vld [vmem:[%s3 + $0x7a0] sm:$0xff]
  %v1313 = vld [vmem:[%s3 + $0x7a8] sm:$0xff]
  %v1314 = vld [vmem:[%s3 + $0x7b0] sm:$0xff]
  %v1315 = vld [vmem:[%s3 + $0x7b8] sm:$0xff]
  %v1316 = vld [vmem:[%s3 + $0x7c0] sm:$0xff]
  %v1317 = vld [vmem:[%s3 + $0x7c8] sm:$0xff]
  %v1318 = vld [vmem:[%s3 + $0x7d0] sm:$0xff]
  %v1319 = vld [vmem:[%s3 + $0x7d8] sm:$0xff]
  %v1320 = vld [vmem:[%s3 + $0x7e0] sm:$0xff]
  %v1321 = vld [vmem:[%s3 + $0x7e8] sm:$0xff]
  %v1322 = vld [vmem:[%s3 + $0x7f0] sm:$0xff]
  %v1323 = vld [vmem:[%s3 + $0x7f8] sm:$0xff]
  %v1324 = vld [vmem:[%s4] sm:$0xf]
  %v1326 = vlaneseq
  %v1327 = vshrl.u32 %v1326, 7
  %v1328 = vsub.s32 0, %v1327
  %v1329 = vrot.slane %v1324, %v1328
  %v1330 = vlaneseq
  %v1331 = vshrl.u32 %v1330, 7
  %v1332 = vsub.s32 1, %v1331
  %v1333 = vrot.slane %v1324, %v1332
  %v1334 = vlaneseq
  %v1335 = vshrl.u32 %v1334, 7
  %v1336 = vsub.s32 2, %v1335
  %v1337 = vrot.slane %v1324, %v1336
  %v1338 = vlaneseq
  %v1339 = vshrl.u32 %v1338, 7
  %v1340 = vsub.s32 3, %v1339
  %v1341 = vrot.slane %v1324, %v1340
  %v1602 = vunpack.c.l.b16 %v1068
  %v1603 = vunpack.c.h.b16 %v1068
  %v1604 = vunpack.c.l.b16 %v1069
  %v1605 = vunpack.c.h.b16 %v1069
  %v1606 = vunpack.c.l.b16 %v1070
  %v1607 = vunpack.c.h.b16 %v1070
  %v1608 = vunpack.c.l.b16 %v1071
  %v1609 = vunpack.c.h.b16 %v1071
  %v1610 = vunpack.c.l.b16 %v1072
  %v1611 = vunpack.c.h.b16 %v1072
  %v1612 = vunpack.c.l.b16 %v1073
  %v1613 = vunpack.c.h.b16 %v1073
  %v1614 = vunpack.c.l.b16 %v1074
  %v1615 = vunpack.c.h.b16 %v1074
  %v1616 = vunpack.c.l.b16 %v1075
  %v1617 = vunpack.c.h.b16 %v1075
  %v1618 = vunpack.c.l.b16 %v1076
  %v1619 = vunpack.c.h.b16 %v1076
  %v1620 = vunpack.c.l.b16 %v1077
  %v1621 = vunpack.c.h.b16 %v1077
  %v1622 = vunpack.c.l.b16 %v1078
  %v1623 = vunpack.c.h.b16 %v1078
  %v1624 = vunpack.c.l.b16 %v1079
  %v1625 = vunpack.c.h.b16 %v1079
  %v1626 = vunpack.c.l.b16 %v1080
  %v1627 = vunpack.c.h.b16 %v1080
  %v1628 = vunpack.c.l.b16 %v1081
  %v1629 = vunpack.c.h.b16 %v1081
  %v1630 = vunpack.c.l.b16 %v1082
  %v1631 = vunpack.c.h.b16 %v1082
  %v1632 = vunpack.c.l.b16 %v1083
  %v1633 = vunpack.c.h.b16 %v1083
  %v1634 = vunpack.c.l.b16 %v1084
  %v1635 = vunpack.c.h.b16 %v1084
  %v1636 = vunpack.c.l.b16 %v1085
  %v1637 = vunpack.c.h.b16 %v1085
  %v1638 = vunpack.c.l.b16 %v1086
  %v1639 = vunpack.c.h.b16 %v1086
  %v1640 = vunpack.c.l.b16 %v1087
  %v1641 = vunpack.c.h.b16 %v1087
  %v1642 = vunpack.c.l.b16 %v1088
  %v1643 = vunpack.c.h.b16 %v1088
  %v1644 = vunpack.c.l.b16 %v1089
  %v1645 = vunpack.c.h.b16 %v1089
  %v1646 = vunpack.c.l.b16 %v1090
  %v1647 = vunpack.c.h.b16 %v1090
  %v1648 = vunpack.c.l.b16 %v1091
  %v1649 = vunpack.c.h.b16 %v1091
  %v1650 = vunpack.c.l.b16 %v1092
  %v1651 = vunpack.c.h.b16 %v1092
  %v1652 = vunpack.c.l.b16 %v1093
  %v1653 = vunpack.c.h.b16 %v1093
  %v1654 = vunpack.c.l.b16 %v1094
  %v1655 = vunpack.c.h.b16 %v1094
  %v1656 = vunpack.c.l.b16 %v1095
  %v1657 = vunpack.c.h.b16 %v1095
  %v1658 = vunpack.c.l.b16 %v1096
  %v1659 = vunpack.c.h.b16 %v1096
  %v1660 = vunpack.c.l.b16 %v1097
  %v1661 = vunpack.c.h.b16 %v1097
  %v1662 = vunpack.c.l.b16 %v1098
  %v1663 = vunpack.c.h.b16 %v1098
  %v1664 = vunpack.c.l.b16 %v1099
  %v1665 = vunpack.c.h.b16 %v1099
  %v1666 = vunpack.c.l.b16 %v1100
  %v1667 = vunpack.c.h.b16 %v1100
  %v1668 = vunpack.c.l.b16 %v1101
  %v1669 = vunpack.c.h.b16 %v1101
  %v1670 = vunpack.c.l.b16 %v1102
  %v1671 = vunpack.c.h.b16 %v1102
  %v1672 = vunpack.c.l.b16 %v1103
  %v1673 = vunpack.c.h.b16 %v1103
  %v1674 = vunpack.c.l.b16 %v1104
  %v1675 = vunpack.c.h.b16 %v1104
  %v1676 = vunpack.c.l.b16 %v1105
  %v1677 = vunpack.c.h.b16 %v1105
  %v1678 = vunpack.c.l.b16 %v1106
  %v1679 = vunpack.c.h.b16 %v1106
  %v1680 = vunpack.c.l.b16 %v1107
  %v1681 = vunpack.c.h.b16 %v1107
  %v1682 = vunpack.c.l.b16 %v1108
  %v1683 = vunpack.c.h.b16 %v1108
  %v1684 = vunpack.c.l.b16 %v1109
  %v1685 = vunpack.c.h.b16 %v1109
  %v1686 = vunpack.c.l.b16 %v1110
  %v1687 = vunpack.c.h.b16 %v1110
  %v1688 = vunpack.c.l.b16 %v1111
  %v1689 = vunpack.c.h.b16 %v1111
  %v1690 = vunpack.c.l.b16 %v1112
  %v1691 = vunpack.c.h.b16 %v1112
  %v1692 = vunpack.c.l.b16 %v1113
  %v1693 = vunpack.c.h.b16 %v1113
  %v1694 = vunpack.c.l.b16 %v1114
  %v1695 = vunpack.c.h.b16 %v1114
  %v1696 = vunpack.c.l.b16 %v1115
  %v1697 = vunpack.c.h.b16 %v1115
  %v1698 = vunpack.c.l.b16 %v1116
  %v1699 = vunpack.c.h.b16 %v1116
  %v1700 = vunpack.c.l.b16 %v1117
  %v1701 = vunpack.c.h.b16 %v1117
  %v1702 = vunpack.c.l.b16 %v1118
  %v1703 = vunpack.c.h.b16 %v1118
  %v1704 = vunpack.c.l.b16 %v1119
  %v1705 = vunpack.c.h.b16 %v1119
  %v1706 = vunpack.c.l.b16 %v1120
  %v1707 = vunpack.c.h.b16 %v1120
  %v1708 = vunpack.c.l.b16 %v1121
  %v1709 = vunpack.c.h.b16 %v1121
  %v1710 = vunpack.c.l.b16 %v1122
  %v1711 = vunpack.c.h.b16 %v1122
  %v1712 = vunpack.c.l.b16 %v1123
  %v1713 = vunpack.c.h.b16 %v1123
  %v1714 = vunpack.c.l.b16 %v1124
  %v1715 = vunpack.c.h.b16 %v1124
  %v1716 = vunpack.c.l.b16 %v1125
  %v1717 = vunpack.c.h.b16 %v1125
  %v1718 = vunpack.c.l.b16 %v1126
  %v1719 = vunpack.c.h.b16 %v1126
  %v1720 = vunpack.c.l.b16 %v1127
  %v1721 = vunpack.c.h.b16 %v1127
  %v1722 = vunpack.c.l.b16 %v1128
  %v1723 = vunpack.c.h.b16 %v1128
  %v1724 = vunpack.c.l.b16 %v1129
  %v1725 = vunpack.c.h.b16 %v1129
  %v1726 = vunpack.c.l.b16 %v1130
  %v1727 = vunpack.c.h.b16 %v1130
  %v1728 = vunpack.c.l.b16 %v1131
  %v1729 = vunpack.c.h.b16 %v1131
  %v1730 = vunpack.c.l.b16 %v1132
  %v1731 = vunpack.c.h.b16 %v1132
  %v1732 = vunpack.c.l.b16 %v1133
  %v1733 = vunpack.c.h.b16 %v1133
  %v1734 = vunpack.c.l.b16 %v1134
  %v1735 = vunpack.c.h.b16 %v1134
  %v1736 = vunpack.c.l.b16 %v1135
  %v1737 = vunpack.c.h.b16 %v1135
  %v1738 = vunpack.c.l.b16 %v1136
  %v1739 = vunpack.c.h.b16 %v1136
  %v1740 = vunpack.c.l.b16 %v1137
  %v1741 = vunpack.c.h.b16 %v1137
  %v1742 = vunpack.c.l.b16 %v1138
  %v1743 = vunpack.c.h.b16 %v1138
  %v1744 = vunpack.c.l.b16 %v1139
  %v1745 = vunpack.c.h.b16 %v1139
  %v1746 = vunpack.c.l.b16 %v1140
  %v1747 = vunpack.c.h.b16 %v1140
  %v1748 = vunpack.c.l.b16 %v1141
  %v1749 = vunpack.c.h.b16 %v1141
  %v1750 = vunpack.c.l.b16 %v1142
  %v1751 = vunpack.c.h.b16 %v1142
  %v1752 = vunpack.c.l.b16 %v1143
  %v1753 = vunpack.c.h.b16 %v1143
  %v1754 = vunpack.c.l.b16 %v1144
  %v1755 = vunpack.c.h.b16 %v1144
  %v1756 = vunpack.c.l.b16 %v1145
  %v1757 = vunpack.c.h.b16 %v1145
  %v1758 = vunpack.c.l.b16 %v1146
  %v1759 = vunpack.c.h.b16 %v1146
  %v1760 = vunpack.c.l.b16 %v1147
  %v1761 = vunpack.c.h.b16 %v1147
  %v1762 = vunpack.c.l.b16 %v1148
  %v1763 = vunpack.c.h.b16 %v1148
  %v1764 = vunpack.c.l.b16 %v1149
  %v1765 = vunpack.c.h.b16 %v1149
  %v1766 = vunpack.c.l.b16 %v1150
  %v1767 = vunpack.c.h.b16 %v1150
  %v1768 = vunpack.c.l.b16 %v1151
  %v1769 = vunpack.c.h.b16 %v1151
  %v1770 = vunpack.c.l.b16 %v1152
  %v1771 = vunpack.c.h.b16 %v1152
  %v1772 = vunpack.c.l.b16 %v1153
  %v1773 = vunpack.c.h.b16 %v1153
  %v1774 = vunpack.c.l.b16 %v1154
  %v1775 = vunpack.c.h.b16 %v1154
  %v1776 = vunpack.c.l.b16 %v1155
  %v1777 = vunpack.c.h.b16 %v1155
  %v1778 = vunpack.c.l.b16 %v1156
  %v1779 = vunpack.c.h.b16 %v1156
  %v1780 = vunpack.c.l.b16 %v1157
  %v1781 = vunpack.c.h.b16 %v1157
  %v1782 = vunpack.c.l.b16 %v1158
  %v1783 = vunpack.c.h.b16 %v1158
  %v1784 = vunpack.c.l.b16 %v1159
  %v1785 = vunpack.c.h.b16 %v1159
  %v1786 = vunpack.c.l.b16 %v1160
  %v1787 = vunpack.c.h.b16 %v1160
  %v1788 = vunpack.c.l.b16 %v1161
  %v1789 = vunpack.c.h.b16 %v1161
  %v1790 = vunpack.c.l.b16 %v1162
  %v1791 = vunpack.c.h.b16 %v1162
  %v1792 = vunpack.c.l.b16 %v1163
  %v1793 = vunpack.c.h.b16 %v1163
  %v1794 = vunpack.c.l.b16 %v1164
  %v1795 = vunpack.c.h.b16 %v1164
  %v1796 = vunpack.c.l.b16 %v1165
  %v1797 = vunpack.c.h.b16 %v1165
  %v1798 = vunpack.c.l.b16 %v1166
  %v1799 = vunpack.c.h.b16 %v1166
  %v1800 = vunpack.c.l.b16 %v1167
  %v1801 = vunpack.c.h.b16 %v1167
  %v1802 = vunpack.c.l.b16 %v1168
  %v1803 = vunpack.c.h.b16 %v1168
  %v1804 = vunpack.c.l.b16 %v1169
  %v1805 = vunpack.c.h.b16 %v1169
  %v1806 = vunpack.c.l.b16 %v1170
  %v1807 = vunpack.c.h.b16 %v1170
  %v1808 = vunpack.c.l.b16 %v1171
  %v1809 = vunpack.c.h.b16 %v1171
  %v1810 = vunpack.c.l.b16 %v1172
  %v1811 = vunpack.c.h.b16 %v1172
  %v1812 = vunpack.c.l.b16 %v1173
  %v1813 = vunpack.c.h.b16 %v1173
  %v1814 = vunpack.c.l.b16 %v1174
  %v1815 = vunpack.c.h.b16 %v1174
  %v1816 = vunpack.c.l.b16 %v1175
  %v1817 = vunpack.c.h.b16 %v1175
  %v1818 = vunpack.c.l.b16 %v1176
  %v1819 = vunpack.c.h.b16 %v1176
  %v1820 = vunpack.c.l.b16 %v1177
  %v1821 = vunpack.c.h.b16 %v1177
  %v1822 = vunpack.c.l.b16 %v1178
  %v1823 = vunpack.c.h.b16 %v1178
  %v1824 = vunpack.c.l.b16 %v1179
  %v1825 = vunpack.c.h.b16 %v1179
  %v1826 = vunpack.c.l.b16 %v1180
  %v1827 = vunpack.c.h.b16 %v1180
  %v1828 = vunpack.c.l.b16 %v1181
  %v1829 = vunpack.c.h.b16 %v1181
  %v1830 = vunpack.c.l.b16 %v1182
  %v1831 = vunpack.c.h.b16 %v1182
  %v1832 = vunpack.c.l.b16 %v1183
  %v1833 = vunpack.c.h.b16 %v1183
  %v1834 = vunpack.c.l.b16 %v1184
  %v1835 = vunpack.c.h.b16 %v1184
  %v1836 = vunpack.c.l.b16 %v1185
  %v1837 = vunpack.c.h.b16 %v1185
  %v1838 = vunpack.c.l.b16 %v1186
  %v1839 = vunpack.c.h.b16 %v1186
  %v1840 = vunpack.c.l.b16 %v1187
  %v1841 = vunpack.c.h.b16 %v1187
  %v1842 = vunpack.c.l.b16 %v1188
  %v1843 = vunpack.c.h.b16 %v1188
  %v1844 = vunpack.c.l.b16 %v1189
  %v1845 = vunpack.c.h.b16 %v1189
  %v1846 = vunpack.c.l.b16 %v1190
  %v1847 = vunpack.c.h.b16 %v1190
  %v1848 = vunpack.c.l.b16 %v1191
  %v1849 = vunpack.c.h.b16 %v1191
  %v1850 = vunpack.c.l.b16 %v1192
  %v1851 = vunpack.c.h.b16 %v1192
  %v1852 = vunpack.c.l.b16 %v1193
  %v1853 = vunpack.c.h.b16 %v1193
  %v1854 = vunpack.c.l.b16 %v1194
  %v1855 = vunpack.c.h.b16 %v1194
  %v1856 = vunpack.c.l.b16 %v1195
  %v1857 = vunpack.c.h.b16 %v1195
  %v1858 = vunpack.c.l.b16 %v1196
  %v1859 = vunpack.c.h.b16 %v1196
  %v1860 = vunpack.c.l.b16 %v1197
  %v1861 = vunpack.c.h.b16 %v1197
  %v1862 = vunpack.c.l.b16 %v1198
  %v1863 = vunpack.c.h.b16 %v1198
  %v1864 = vunpack.c.l.b16 %v1199
  %v1865 = vunpack.c.h.b16 %v1199
  %v1866 = vunpack.c.l.b16 %v1200
  %v1867 = vunpack.c.h.b16 %v1200
  %v1868 = vunpack.c.l.b16 %v1201
  %v1869 = vunpack.c.h.b16 %v1201
  %v1870 = vunpack.c.l.b16 %v1202
  %v1871 = vunpack.c.h.b16 %v1202
  %v1872 = vunpack.c.l.b16 %v1203
  %v1873 = vunpack.c.h.b16 %v1203
  %v1874 = vunpack.c.l.b16 %v1204
  %v1875 = vunpack.c.h.b16 %v1204
  %v1876 = vunpack.c.l.b16 %v1205
  %v1877 = vunpack.c.h.b16 %v1205
  %v1878 = vunpack.c.l.b16 %v1206
  %v1879 = vunpack.c.h.b16 %v1206
  %v1880 = vunpack.c.l.b16 %v1207
  %v1881 = vunpack.c.h.b16 %v1207
  %v1882 = vunpack.c.l.b16 %v1208
  %v1883 = vunpack.c.h.b16 %v1208
  %v1884 = vunpack.c.l.b16 %v1209
  %v1885 = vunpack.c.h.b16 %v1209
  %v1886 = vunpack.c.l.b16 %v1210
  %v1887 = vunpack.c.h.b16 %v1210
  %v1888 = vunpack.c.l.b16 %v1211
  %v1889 = vunpack.c.h.b16 %v1211
  %v1890 = vunpack.c.l.b16 %v1212
  %v1891 = vunpack.c.h.b16 %v1212
  %v1892 = vunpack.c.l.b16 %v1213
  %v1893 = vunpack.c.h.b16 %v1213
  %v1894 = vunpack.c.l.b16 %v1214
  %v1895 = vunpack.c.h.b16 %v1214
  %v1896 = vunpack.c.l.b16 %v1215
  %v1897 = vunpack.c.h.b16 %v1215
  %v1898 = vunpack.c.l.b16 %v1216
  %v1899 = vunpack.c.h.b16 %v1216
  %v1900 = vunpack.c.l.b16 %v1217
  %v1901 = vunpack.c.h.b16 %v1217
  %v1902 = vunpack.c.l.b16 %v1218
  %v1903 = vunpack.c.h.b16 %v1218
  %v1904 = vunpack.c.l.b16 %v1219
  %v1905 = vunpack.c.h.b16 %v1219
  %v1906 = vunpack.c.l.b16 %v1220
  %v1907 = vunpack.c.h.b16 %v1220
  %v1908 = vunpack.c.l.b16 %v1221
  %v1909 = vunpack.c.h.b16 %v1221
  %v1910 = vunpack.c.l.b16 %v1222
  %v1911 = vunpack.c.h.b16 %v1222
  %v1912 = vunpack.c.l.b16 %v1223
  %v1913 = vunpack.c.h.b16 %v1223
  %v1914 = vunpack.c.l.b16 %v1224
  %v1915 = vunpack.c.h.b16 %v1224
  %v1916 = vunpack.c.l.b16 %v1225
  %v1917 = vunpack.c.h.b16 %v1225
  %v1918 = vunpack.c.l.b16 %v1226
  %v1919 = vunpack.c.h.b16 %v1226
  %v1920 = vunpack.c.l.b16 %v1227
  %v1921 = vunpack.c.h.b16 %v1227
  %v1922 = vunpack.c.l.b16 %v1228
  %v1923 = vunpack.c.h.b16 %v1228
  %v1924 = vunpack.c.l.b16 %v1229
  %v1925 = vunpack.c.h.b16 %v1229
  %v1926 = vunpack.c.l.b16 %v1230
  %v1927 = vunpack.c.h.b16 %v1230
  %v1928 = vunpack.c.l.b16 %v1231
  %v1929 = vunpack.c.h.b16 %v1231
  %v1930 = vunpack.c.l.b16 %v1232
  %v1931 = vunpack.c.h.b16 %v1232
  %v1932 = vunpack.c.l.b16 %v1233
  %v1933 = vunpack.c.h.b16 %v1233
  %v1934 = vunpack.c.l.b16 %v1234
  %v1935 = vunpack.c.h.b16 %v1234
  %v1936 = vunpack.c.l.b16 %v1235
  %v1937 = vunpack.c.h.b16 %v1235
  %v1938 = vunpack.c.l.b16 %v1236
  %v1939 = vunpack.c.h.b16 %v1236
  %v1940 = vunpack.c.l.b16 %v1237
  %v1941 = vunpack.c.h.b16 %v1237
  %v1942 = vunpack.c.l.b16 %v1238
  %v1943 = vunpack.c.h.b16 %v1238
  %v1944 = vunpack.c.l.b16 %v1239
  %v1945 = vunpack.c.h.b16 %v1239
  %v1946 = vunpack.c.l.b16 %v1240
  %v1947 = vunpack.c.h.b16 %v1240
  %v1948 = vunpack.c.l.b16 %v1241
  %v1949 = vunpack.c.h.b16 %v1241
  %v1950 = vunpack.c.l.b16 %v1242
  %v1951 = vunpack.c.h.b16 %v1242
  %v1952 = vunpack.c.l.b16 %v1243
  %v1953 = vunpack.c.h.b16 %v1243
  %v1954 = vunpack.c.l.b16 %v1244
  %v1955 = vunpack.c.h.b16 %v1244
  %v1956 = vunpack.c.l.b16 %v1245
  %v1957 = vunpack.c.h.b16 %v1245
  %v1958 = vunpack.c.l.b16 %v1246
  %v1959 = vunpack.c.h.b16 %v1246
  %v1960 = vunpack.c.l.b16 %v1247
  %v1961 = vunpack.c.h.b16 %v1247
  %v1962 = vunpack.c.l.b16 %v1248
  %v1963 = vunpack.c.h.b16 %v1248
  %v1964 = vunpack.c.l.b16 %v1249
  %v1965 = vunpack.c.h.b16 %v1249
  %v1966 = vunpack.c.l.b16 %v1250
  %v1967 = vunpack.c.h.b16 %v1250
  %v1968 = vunpack.c.l.b16 %v1251
  %v1969 = vunpack.c.h.b16 %v1251
  %v1970 = vunpack.c.l.b16 %v1252
  %v1971 = vunpack.c.h.b16 %v1252
  %v1972 = vunpack.c.l.b16 %v1253
  %v1973 = vunpack.c.h.b16 %v1253
  %v1974 = vunpack.c.l.b16 %v1254
  %v1975 = vunpack.c.h.b16 %v1254
  %v1976 = vunpack.c.l.b16 %v1255
  %v1977 = vunpack.c.h.b16 %v1255
  %v1978 = vunpack.c.l.b16 %v1256
  %v1979 = vunpack.c.h.b16 %v1256
  %v1980 = vunpack.c.l.b16 %v1257
  %v1981 = vunpack.c.h.b16 %v1257
  %v1982 = vunpack.c.l.b16 %v1258
  %v1983 = vunpack.c.h.b16 %v1258
  %v1984 = vunpack.c.l.b16 %v1259
  %v1985 = vunpack.c.h.b16 %v1259
  %v1986 = vunpack.c.l.b16 %v1260
  %v1987 = vunpack.c.h.b16 %v1260
  %v1988 = vunpack.c.l.b16 %v1261
  %v1989 = vunpack.c.h.b16 %v1261
  %v1990 = vunpack.c.l.b16 %v1262
  %v1991 = vunpack.c.h.b16 %v1262
  %v1992 = vunpack.c.l.b16 %v1263
  %v1993 = vunpack.c.h.b16 %v1263
  %v1994 = vunpack.c.l.b16 %v1264
  %v1995 = vunpack.c.h.b16 %v1264
  %v1996 = vunpack.c.l.b16 %v1265
  %v1997 = vunpack.c.h.b16 %v1265
  %v1998 = vunpack.c.l.b16 %v1266
  %v1999 = vunpack.c.h.b16 %v1266
  %v2000 = vunpack.c.l.b16 %v1267
  %v2001 = vunpack.c.h.b16 %v1267
  %v2002 = vunpack.c.l.b16 %v1268
  %v2003 = vunpack.c.h.b16 %v1268
  %v2004 = vunpack.c.l.b16 %v1269
  %v2005 = vunpack.c.h.b16 %v1269
  %v2006 = vunpack.c.l.b16 %v1270
  %v2007 = vunpack.c.h.b16 %v1270
  %v2008 = vunpack.c.l.b16 %v1271
  %v2009 = vunpack.c.h.b16 %v1271
  %v2010 = vunpack.c.l.b16 %v1272
  %v2011 = vunpack.c.h.b16 %v1272
  %v2012 = vunpack.c.l.b16 %v1273
  %v2013 = vunpack.c.h.b16 %v1273
  %v2014 = vunpack.c.l.b16 %v1274
  %v2015 = vunpack.c.h.b16 %v1274
  %v2016 = vunpack.c.l.b16 %v1275
  %v2017 = vunpack.c.h.b16 %v1275
  %v2018 = vunpack.c.l.b16 %v1276
  %v2019 = vunpack.c.h.b16 %v1276
  %v2020 = vunpack.c.l.b16 %v1277
  %v2021 = vunpack.c.h.b16 %v1277
  %v2022 = vunpack.c.l.b16 %v1278
  %v2023 = vunpack.c.h.b16 %v1278
  %v2024 = vunpack.c.l.b16 %v1279
  %v2025 = vunpack.c.h.b16 %v1279
  %v2026 = vunpack.c.l.b16 %v1280
  %v2027 = vunpack.c.h.b16 %v1280
  %v2028 = vunpack.c.l.b16 %v1281
  %v2029 = vunpack.c.h.b16 %v1281
  %v2030 = vunpack.c.l.b16 %v1282
  %v2031 = vunpack.c.h.b16 %v1282
  %v2032 = vunpack.c.l.b16 %v1283
  %v2033 = vunpack.c.h.b16 %v1283
  %v2034 = vunpack.c.l.b16 %v1284
  %v2035 = vunpack.c.h.b16 %v1284
  %v2036 = vunpack.c.l.b16 %v1285
  %v2037 = vunpack.c.h.b16 %v1285
  %v2038 = vunpack.c.l.b16 %v1286
  %v2039 = vunpack.c.h.b16 %v1286
  %v2040 = vunpack.c.l.b16 %v1287
  %v2041 = vunpack.c.h.b16 %v1287
  %v2042 = vunpack.c.l.b16 %v1288
  %v2043 = vunpack.c.h.b16 %v1288
  %v2044 = vunpack.c.l.b16 %v1289
  %v2045 = vunpack.c.h.b16 %v1289
  %v2046 = vunpack.c.l.b16 %v1290
  %v2047 = vunpack.c.h.b16 %v1290
  %v2048 = vunpack.c.l.b16 %v1291
  %v2049 = vunpack.c.h.b16 %v1291
  %v2050 = vunpack.c.l.b16 %v1292
  %v2051 = vunpack.c.h.b16 %v1292
  %v2052 = vunpack.c.l.b16 %v1293
  %v2053 = vunpack.c.h.b16 %v1293
  %v2054 = vunpack.c.l.b16 %v1294
  %v2055 = vunpack.c.h.b16 %v1294
  %v2056 = vunpack.c.l.b16 %v1295
  %v2057 = vunpack.c.h.b16 %v1295
  %v2058 = vunpack.c.l.b16 %v1296
  %v2059 = vunpack.c.h.b16 %v1296
  %v2060 = vunpack.c.l.b16 %v1297
  %v2061 = vunpack.c.h.b16 %v1297
  %v2062 = vunpack.c.l.b16 %v1298
  %v2063 = vunpack.c.h.b16 %v1298
  %v2064 = vunpack.c.l.b16 %v1299
  %v2065 = vunpack.c.h.b16 %v1299
  %v2066 = vunpack.c.l.b16 %v1300
  %v2067 = vunpack.c.h.b16 %v1300
  %v2068 = vunpack.c.l.b16 %v1301
  %v2069 = vunpack.c.h.b16 %v1301
  %v2070 = vunpack.c.l.b16 %v1302
  %v2071 = vunpack.c.h.b16 %v1302
  %v2072 = vunpack.c.l.b16 %v1303
  %v2073 = vunpack.c.h.b16 %v1303
  %v2074 = vunpack.c.l.b16 %v1304
  %v2075 = vunpack.c.h.b16 %v1304
  %v2076 = vunpack.c.l.b16 %v1305
  %v2077 = vunpack.c.h.b16 %v1305
  %v2078 = vunpack.c.l.b16 %v1306
  %v2079 = vunpack.c.h.b16 %v1306
  %v2080 = vunpack.c.l.b16 %v1307
  %v2081 = vunpack.c.h.b16 %v1307
  %v2082 = vunpack.c.l.b16 %v1308
  %v2083 = vunpack.c.h.b16 %v1308
  %v2084 = vunpack.c.l.b16 %v1309
  %v2085 = vunpack.c.h.b16 %v1309
  %v2086 = vunpack.c.l.b16 %v1310
  %v2087 = vunpack.c.h.b16 %v1310
  %v2088 = vunpack.c.l.b16 %v1311
  %v2089 = vunpack.c.h.b16 %v1311
  %v2090 = vunpack.c.l.b16 %v1312
  %v2091 = vunpack.c.h.b16 %v1312
  %v2092 = vunpack.c.l.b16 %v1313
  %v2093 = vunpack.c.h.b16 %v1313
  %v2094 = vunpack.c.l.b16 %v1314
  %v2095 = vunpack.c.h.b16 %v1314
  %v2096 = vunpack.c.l.b16 %v1315
  %v2097 = vunpack.c.h.b16 %v1315
  %v2098 = vunpack.c.l.b16 %v1316
  %v2099 = vunpack.c.h.b16 %v1316
  %v2100 = vunpack.c.l.b16 %v1317
  %v2101 = vunpack.c.h.b16 %v1317
  %v2102 = vunpack.c.l.b16 %v1318
  %v2103 = vunpack.c.h.b16 %v1318
  %v2104 = vunpack.c.l.b16 %v1319
  %v2105 = vunpack.c.h.b16 %v1319
  %v2106 = vunpack.c.l.b16 %v1320
  %v2107 = vunpack.c.h.b16 %v1320
  %v2108 = vunpack.c.l.b16 %v1321
  %v2109 = vunpack.c.h.b16 %v1321
  %v2110 = vunpack.c.l.b16 %v1322
  %v2111 = vunpack.c.h.b16 %v1322
  %v2112 = vunpack.c.l.b16 %v1323
  %v2113 = vunpack.c.h.b16 %v1323
  %v2114 = vpack.c.b16 %v1606, %v1602
  %v2115 = vpack.c.b16 %v1607, %v1603
  %v2116 = vpack.c.b16 %v1608, %v1604
  %v2117 = vpack.c.b16 %v1609, %v1605
  %v2118 = vpack.c.b16 %v1614, %v1610
  %v2119 = vpack.c.b16 %v1615, %v1611
  %v2120 = vpack.c.b16 %v1616, %v1612
  %v2121 = vpack.c.b16 %v1617, %v1613
  %v2122 = vpack.c.b16 %v1622, %v1618
  %v2123 = vpack.c.b16 %v1623, %v1619
  %v2124 = vpack.c.b16 %v1624, %v1620
  %v2125 = vpack.c.b16 %v1625, %v1621
  %v2126 = vpack.c.b16 %v1630, %v1626
  %v2127 = vpack.c.b16 %v1631, %v1627
  %v2128 = vpack.c.b16 %v1632, %v1628
  %v2129 = vpack.c.b16 %v1633, %v1629
  %v2130 = vpack.c.b16 %v1638, %v1634
  %v2131 = vpack.c.b16 %v1639, %v1635
  %v2132 = vpack.c.b16 %v1640, %v1636
  %v2133 = vpack.c.b16 %v1641, %v1637
  %v2134 = vpack.c.b16 %v1646, %v1642
  %v2135 = vpack.c.b16 %v1647, %v1643
  %v2136 = vpack.c.b16 %v1648, %v1644
  %v2137 = vpack.c.b16 %v1649, %v1645
  %v2138 = vpack.c.b16 %v1654, %v1650
  %v2139 = vpack.c.b16 %v1655, %v1651
  %v2140 = vpack.c.b16 %v1656, %v1652
  %v2141 = vpack.c.b16 %v1657, %v1653
  %v2142 = vpack.c.b16 %v1662, %v1658
  %v2143 = vpack.c.b16 %v1663, %v1659
  %v2144 = vpack.c.b16 %v1664, %v1660
  %v2145 = vpack.c.b16 %v1665, %v1661
  %v2146 = vpack.c.b16 %v1670, %v1666
  %v2147 = vpack.c.b16 %v1671, %v1667
  %v2148 = vpack.c.b16 %v1672, %v1668
  %v2149 = vpack.c.b16 %v1673, %v1669
  %v2150 = vpack.c.b16 %v1678, %v1674
  %v2151 = vpack.c.b16 %v1679, %v1675
  %v2152 = vpack.c.b16 %v1680, %v1676
  %v2153 = vpack.c.b16 %v1681, %v1677
  %v2154 = vpack.c.b16 %v1686, %v1682
  %v2155 = vpack.c.b16 %v1687, %v1683
  %v2156 = vpack.c.b16 %v1688, %v1684
  %v2157 = vpack.c.b16 %v1689, %v1685
  %v2158 = vpack.c.b16 %v1694, %v1690
  %v2159 = vpack.c.b16 %v1695, %v1691
  %v2160 = vpack.c.b16 %v1696, %v1692
  %v2161 = vpack.c.b16 %v1697, %v1693
  %v2162 = vpack.c.b16 %v1702, %v1698
  %v2163 = vpack.c.b16 %v1703, %v1699
  %v2164 = vpack.c.b16 %v1704, %v1700
  %v2165 = vpack.c.b16 %v1705, %v1701
  %v2166 = vpack.c.b16 %v1710, %v1706
  %v2167 = vpack.c.b16 %v1711, %v1707
  %v2168 = vpack.c.b16 %v1712, %v1708
  %v2169 = vpack.c.b16 %v1713, %v1709
  %v2170 = vpack.c.b16 %v1718, %v1714
  %v2171 = vpack.c.b16 %v1719, %v1715
  %v2172 = vpack.c.b16 %v1720, %v1716
  %v2173 = vpack.c.b16 %v1721, %v1717
  %v2174 = vpack.c.b16 %v1726, %v1722
  %v2175 = vpack.c.b16 %v1727, %v1723
  %v2176 = vpack.c.b16 %v1728, %v1724
  %v2177 = vpack.c.b16 %v1729, %v1725
  %v2178 = vpack.c.b16 %v1734, %v1730
  %v2179 = vpack.c.b16 %v1735, %v1731
  %v2180 = vpack.c.b16 %v1736, %v1732
  %v2181 = vpack.c.b16 %v1737, %v1733
  %v2182 = vpack.c.b16 %v1742, %v1738
  %v2183 = vpack.c.b16 %v1743, %v1739
  %v2184 = vpack.c.b16 %v1744, %v1740
  %v2185 = vpack.c.b16 %v1745, %v1741
  %v2186 = vpack.c.b16 %v1750, %v1746
  %v2187 = vpack.c.b16 %v1751, %v1747
  %v2188 = vpack.c.b16 %v1752, %v1748
  %v2189 = vpack.c.b16 %v1753, %v1749
  %v2190 = vpack.c.b16 %v1758, %v1754
  %v2191 = vpack.c.b16 %v1759, %v1755
  %v2192 = vpack.c.b16 %v1760, %v1756
  %v2193 = vpack.c.b16 %v1761, %v1757
  %v2194 = vpack.c.b16 %v1766, %v1762
  %v2195 = vpack.c.b16 %v1767, %v1763
  %v2196 = vpack.c.b16 %v1768, %v1764
  %v2197 = vpack.c.b16 %v1769, %v1765
  %v2198 = vpack.c.b16 %v1774, %v1770
  %v2199 = vpack.c.b16 %v1775, %v1771
  %v2200 = vpack.c.b16 %v1776, %v1772
  %v2201 = vpack.c.b16 %v1777, %v1773
  %v2202 = vpack.c.b16 %v1782, %v1778
  %v2203 = vpack.c.b16 %v1783, %v1779
  %v2204 = vpack.c.b16 %v1784, %v1780
  %v2205 = vpack.c.b16 %v1785, %v1781
  %v2206 = vpack.c.b16 %v1790, %v1786
  %v2207 = vpack.c.b16 %v1791, %v1787
  %v2208 = vpack.c.b16 %v1792, %v1788
  %v2209 = vpack.c.b16 %v1793, %v1789
  %v2210 = vpack.c.b16 %v1798, %v1794
  %v2211 = vpack.c.b16 %v1799, %v1795
  %v2212 = vpack.c.b16 %v1800, %v1796
  %v2213 = vpack.c.b16 %v1801, %v1797
  %v2214 = vpack.c.b16 %v1806, %v1802
  %v2215 = vpack.c.b16 %v1807, %v1803
  %v2216 = vpack.c.b16 %v1808, %v1804
  %v2217 = vpack.c.b16 %v1809, %v1805
  %v2218 = vpack.c.b16 %v1814, %v1810
  %v2219 = vpack.c.b16 %v1815, %v1811
  %v2220 = vpack.c.b16 %v1816, %v1812
  %v2221 = vpack.c.b16 %v1817, %v1813
  %v2222 = vpack.c.b16 %v1822, %v1818
  %v2223 = vpack.c.b16 %v1823, %v1819
  %v2224 = vpack.c.b16 %v1824, %v1820
  %v2225 = vpack.c.b16 %v1825, %v1821
  %v2226 = vpack.c.b16 %v1830, %v1826
  %v2227 = vpack.c.b16 %v1831, %v1827
  %v2228 = vpack.c.b16 %v1832, %v1828
  %v2229 = vpack.c.b16 %v1833, %v1829
  %v2230 = vpack.c.b16 %v1838, %v1834
  %v2231 = vpack.c.b16 %v1839, %v1835
  %v2232 = vpack.c.b16 %v1840, %v1836
  %v2233 = vpack.c.b16 %v1841, %v1837
  %v2234 = vpack.c.b16 %v1846, %v1842
  %v2235 = vpack.c.b16 %v1847, %v1843
  %v2236 = vpack.c.b16 %v1848, %v1844
  %v2237 = vpack.c.b16 %v1849, %v1845
  %v2238 = vpack.c.b16 %v1854, %v1850
  %v2239 = vpack.c.b16 %v1855, %v1851
  %v2240 = vpack.c.b16 %v1856, %v1852
  %v2241 = vpack.c.b16 %v1857, %v1853
  %v2242 = vpack.c.b16 %v1862, %v1858
  %v2243 = vpack.c.b16 %v1863, %v1859
  %v2244 = vpack.c.b16 %v1864, %v1860
  %v2245 = vpack.c.b16 %v1865, %v1861
  %v2246 = vpack.c.b16 %v1870, %v1866
  %v2247 = vpack.c.b16 %v1871, %v1867
  %v2248 = vpack.c.b16 %v1872, %v1868
  %v2249 = vpack.c.b16 %v1873, %v1869
  %v2250 = vpack.c.b16 %v1878, %v1874
  %v2251 = vpack.c.b16 %v1879, %v1875
  %v2252 = vpack.c.b16 %v1880, %v1876
  %v2253 = vpack.c.b16 %v1881, %v1877
  %v2254 = vpack.c.b16 %v1886, %v1882
  %v2255 = vpack.c.b16 %v1887, %v1883
  %v2256 = vpack.c.b16 %v1888, %v1884
  %v2257 = vpack.c.b16 %v1889, %v1885
  %v2258 = vpack.c.b16 %v1894, %v1890
  %v2259 = vpack.c.b16 %v1895, %v1891
  %v2260 = vpack.c.b16 %v1896, %v1892
  %v2261 = vpack.c.b16 %v1897, %v1893
  %v2262 = vpack.c.b16 %v1902, %v1898
  %v2263 = vpack.c.b16 %v1903, %v1899
  %v2264 = vpack.c.b16 %v1904, %v1900
  %v2265 = vpack.c.b16 %v1905, %v1901
  %v2266 = vpack.c.b16 %v1910, %v1906
  %v2267 = vpack.c.b16 %v1911, %v1907
  %v2268 = vpack.c.b16 %v1912, %v1908
  %v2269 = vpack.c.b16 %v1913, %v1909
  %v2270 = vpack.c.b16 %v1918, %v1914
  %v2271 = vpack.c.b16 %v1919, %v1915
  %v2272 = vpack.c.b16 %v1920, %v1916
  %v2273 = vpack.c.b16 %v1921, %v1917
  %v2274 = vpack.c.b16 %v1926, %v1922
  %v2275 = vpack.c.b16 %v1927, %v1923
  %v2276 = vpack.c.b16 %v1928, %v1924
  %v2277 = vpack.c.b16 %v1929, %v1925
  %v2278 = vpack.c.b16 %v1934, %v1930
  %v2279 = vpack.c.b16 %v1935, %v1931
  %v2280 = vpack.c.b16 %v1936, %v1932
  %v2281 = vpack.c.b16 %v1937, %v1933
  %v2282 = vpack.c.b16 %v1942, %v1938
  %v2283 = vpack.c.b16 %v1943, %v1939
  %v2284 = vpack.c.b16 %v1944, %v1940
  %v2285 = vpack.c.b16 %v1945, %v1941
  %v2286 = vpack.c.b16 %v1950, %v1946
  %v2287 = vpack.c.b16 %v1951, %v1947
  %v2288 = vpack.c.b16 %v1952, %v1948
  %v2289 = vpack.c.b16 %v1953, %v1949
  %v2290 = vpack.c.b16 %v1958, %v1954
  %v2291 = vpack.c.b16 %v1959, %v1955
  %v2292 = vpack.c.b16 %v1960, %v1956
  %v2293 = vpack.c.b16 %v1961, %v1957
  %v2294 = vpack.c.b16 %v1966, %v1962
  %v2295 = vpack.c.b16 %v1967, %v1963
  %v2296 = vpack.c.b16 %v1968, %v1964
  %v2297 = vpack.c.b16 %v1969, %v1965
  %v2298 = vpack.c.b16 %v1974, %v1970
  %v2299 = vpack.c.b16 %v1975, %v1971
  %v2300 = vpack.c.b16 %v1976, %v1972
  %v2301 = vpack.c.b16 %v1977, %v1973
  %v2302 = vpack.c.b16 %v1982, %v1978
  %v2303 = vpack.c.b16 %v1983, %v1979
  %v2304 = vpack.c.b16 %v1984, %v1980
  %v2305 = vpack.c.b16 %v1985, %v1981
  %v2306 = vpack.c.b16 %v1990, %v1986
  %v2307 = vpack.c.b16 %v1991, %v1987
  %v2308 = vpack.c.b16 %v1992, %v1988
  %v2309 = vpack.c.b16 %v1993, %v1989
  %v2310 = vpack.c.b16 %v1998, %v1994
  %v2311 = vpack.c.b16 %v1999, %v1995
  %v2312 = vpack.c.b16 %v2000, %v1996
  %v2313 = vpack.c.b16 %v2001, %v1997
  %v2314 = vpack.c.b16 %v2006, %v2002
  %v2315 = vpack.c.b16 %v2007, %v2003
  %v2316 = vpack.c.b16 %v2008, %v2004
  %v2317 = vpack.c.b16 %v2009, %v2005
  %v2318 = vpack.c.b16 %v2014, %v2010
  %v2319 = vpack.c.b16 %v2015, %v2011
  %v2320 = vpack.c.b16 %v2016, %v2012
  %v2321 = vpack.c.b16 %v2017, %v2013
  %v2322 = vpack.c.b16 %v2022, %v2018
  %v2323 = vpack.c.b16 %v2023, %v2019
  %v2324 = vpack.c.b16 %v2024, %v2020
  %v2325 = vpack.c.b16 %v2025, %v2021
  %v2326 = vpack.c.b16 %v2030, %v2026
  %v2327 = vpack.c.b16 %v2031, %v2027
  %v2328 = vpack.c.b16 %v2032, %v2028
  %v2329 = vpack.c.b16 %v2033, %v2029
  %v2330 = vpack.c.b16 %v2038, %v2034
  %v2331 = vpack.c.b16 %v2039, %v2035
  %v2332 = vpack.c.b16 %v2040, %v2036
  %v2333 = vpack.c.b16 %v2041, %v2037
  %v2334 = vpack.c.b16 %v2046, %v2042
  %v2335 = vpack.c.b16 %v2047, %v2043
  %v2336 = vpack.c.b16 %v2048, %v2044
  %v2337 = vpack.c.b16 %v2049, %v2045
  %v2338 = vpack.c.b16 %v2054, %v2050
  %v2339 = vpack.c.b16 %v2055, %v2051
  %v2340 = vpack.c.b16 %v2056, %v2052
  %v2341 = vpack.c.b16 %v2057, %v2053
  %v2342 = vpack.c.b16 %v2062, %v2058
  %v2343 = vpack.c.b16 %v2063, %v2059
  %v2344 = vpack.c.b16 %v2064, %v2060
  %v2345 = vpack.c.b16 %v2065, %v2061
  %v2346 = vpack.c.b16 %v2070, %v2066
  %v2347 = vpack.c.b16 %v2071, %v2067
  %v2348 = vpack.c.b16 %v2072, %v2068
  %v2349 = vpack.c.b16 %v2073, %v2069
  %v2350 = vpack.c.b16 %v2078, %v2074
  %v2351 = vpack.c.b16 %v2079, %v2075
  %v2352 = vpack.c.b16 %v2080, %v2076
  %v2353 = vpack.c.b16 %v2081, %v2077
  %v2354 = vpack.c.b16 %v2086, %v2082
  %v2355 = vpack.c.b16 %v2087, %v2083
  %v2356 = vpack.c.b16 %v2088, %v2084
  %v2357 = vpack.c.b16 %v2089, %v2085
  %v2358 = vpack.c.b16 %v2094, %v2090
  %v2359 = vpack.c.b16 %v2095, %v2091
  %v2360 = vpack.c.b16 %v2096, %v2092
  %v2361 = vpack.c.b16 %v2097, %v2093
  %v2362 = vpack.c.b16 %v2102, %v2098
  %v2363 = vpack.c.b16 %v2103, %v2099
  %v2364 = vpack.c.b16 %v2104, %v2100
  %v2365 = vpack.c.b16 %v2105, %v2101
  %v2366 = vpack.c.b16 %v2110, %v2106
  %v2367 = vpack.c.b16 %v2111, %v2107
  %v2368 = vpack.c.b16 %v2112, %v2108
  %v2369 = vpack.c.b16 %v2113, %v2109
  %2626 = vmatprep.subr.bf16.mxu0 %v2115
  %2627 = vmatpush1.bf16.msra.mxu0 %v2114
  %2628 = vmatprep.subr.bf16.mxu0 %v2119
  %2629 = vmatpush1.bf16.msra.mxu0 %v2118
  %2630 = vmatprep.subr.bf16.mxu0 %v2123
  %2631 = vmatpush1.bf16.msra.mxu0 %v2122
  %2632 = vmatprep.subr.bf16.mxu0 %v2127
  %2633 = vmatpush1.bf16.msra.mxu0 %v2126
  %2634 = vmatprep.subr.bf16.mxu0 %v2131
  %2635 = vmatpush1.bf16.msra.mxu0 %v2130
  %2636 = vmatprep.subr.bf16.mxu0 %v2135
  %2637 = vmatpush1.bf16.msra.mxu0 %v2134
  %2638 = vmatprep.subr.bf16.mxu0 %v2139
  %2639 = vmatpush1.bf16.msra.mxu0 %v2138
  %2640 = vmatprep.subr.bf16.mxu0 %v2143
  %2641 = vmatpush1.bf16.msra.mxu0 %v2142
  %2642 = vmatprep.subr.bf16.mxu0 %v2147
  %2643 = vmatpush1.bf16.msra.mxu0 %v2146
  %2644 = vmatprep.subr.bf16.mxu0 %v2151
  %2645 = vmatpush1.bf16.msra.mxu0 %v2150
  %2646 = vmatprep.subr.bf16.mxu0 %v2155
  %2647 = vmatpush1.bf16.msra.mxu0 %v2154
  %2648 = vmatprep.subr.bf16.mxu0 %v2159
  %2649 = vmatpush1.bf16.msra.mxu0 %v2158
  %2650 = vmatprep.subr.bf16.mxu0 %v2163
  %2651 = vmatpush1.bf16.msra.mxu0 %v2162
  %2652 = vmatprep.subr.bf16.mxu0 %v2167
  %2653 = vmatpush1.bf16.msra.mxu0 %v2166
  %2654 = vmatprep.subr.bf16.mxu0 %v2171
  %2655 = vmatpush1.bf16.msra.mxu0 %v2170
  %2656 = vmatprep.subr.bf16.mxu0 %v2175
  %2657 = vmatpush1.bf16.msra.mxu0 %v2174
  %2658 = vmatprep.mubr.bf16.mxu0 %v1061
  %2659 = vmatmul.mubr.bf16.gmra.mrb[0].mxu0 %v1060
  %v2660 = vpop.f32.mrb[0].mxu0
  %v2661 = vadd.f32 %v1329, %v2660
  %v2662 = vpop.f32.mrb[0].mxu0
  %v2663 = vadd.f32 %v1333, %v2662
  %v2664 = vpop.f32.mrb[0].mxu0
  %v2665 = vadd.f32 %v1329, %v2664
  %v2666 = vpop.f32.mrb[0].mxu0
  %v2667 = vadd.f32 %v1333, %v2666
  %2668 = vdwg.mxu0
  %2669 = vmatprep.subr.bf16.mxu0 %v2179
  %2670 = vmatpush1.bf16.msra.mxu0 %v2178
  %2671 = vmatprep.subr.bf16.mxu0 %v2183
  %2672 = vmatpush1.bf16.msra.mxu0 %v2182
  %2673 = vmatprep.subr.bf16.mxu0 %v2187
  %2674 = vmatpush1.bf16.msra.mxu0 %v2186
  %2675 = vmatprep.subr.bf16.mxu0 %v2191
  %2676 = vmatpush1.bf16.msra.mxu0 %v2190
  %2677 = vmatprep.subr.bf16.mxu0 %v2195
  %2678 = vmatpush1.bf16.msra.mxu0 %v2194
  %2679 = vmatprep.subr.bf16.mxu0 %v2199
  %2680 = vmatpush1.bf16.msra.mxu0 %v2198
  %2681 = vmatprep.subr.bf16.mxu0 %v2203
  %2682 = vmatpush1.bf16.msra.mxu0 %v2202
  %2683 = vmatprep.subr.bf16.mxu0 %v2207
  %2684 = vmatpush1.bf16.msra.mxu0 %v2206
  %2685 = vmatprep.subr.bf16.mxu0 %v2211
  %2686 = vmatpush1.bf16.msra.mxu0 %v2210
  %2687 = vmatprep.subr.bf16.mxu0 %v2215
  %2688 = vmatpush1.bf16.msra.mxu0 %v2214
  %2689 = vmatprep.subr.bf16.mxu0 %v2219
  %2690 = vmatpush1.bf16.msra.mxu0 %v2218
  %2691 = vmatprep.subr.bf16.mxu0 %v2223
  %2692 = vmatpush1.bf16.msra.mxu0 %v2222
  %2693 = vmatprep.subr.bf16.mxu0 %v2227
  %2694 = vmatpush1.bf16.msra.mxu0 %v2226
  %2695 = vmatprep.subr.bf16.mxu0 %v2231
  %2696 = vmatpush1.bf16.msra.mxu0 %v2230
  %2697 = vmatprep.subr.bf16.mxu0 %v2235
  %2698 = vmatpush1.bf16.msra.mxu0 %v2234
  %2699 = vmatprep.subr.bf16.mxu0 %v2239
  %2700 = vmatpush1.bf16.msra.mxu0 %v2238
  %2701 = vmatprep.mubr.bf16.mxu0 %v1063
  %2702 = vmatmul.mubr.bf16.gmra.mrb[0].mxu0 %v1062
  %v2703 = vpop.f32.mrb[0].mxu0
  %v2704 = vadd.f32 %v2661, %v2703
  %v2705 = vpop.f32.mrb[0].mxu0
  %v2706 = vadd.f32 %v2663, %v2705
  %v2707 = vpop.f32.mrb[0].mxu0
  %v2708 = vadd.f32 %v2665, %v2707
  %v2709 = vpop.f32.mrb[0].mxu0
  %v2710 = vadd.f32 %v2667, %v2709
  %2711 = vdwg.mxu0
  %2712 = vmatprep.subr.bf16.mxu0 %v2243
  %2713 = vmatpush1.bf16.msra.mxu0 %v2242
  %2714 = vmatprep.subr.bf16.mxu0 %v2247
  %2715 = vmatpush1.bf16.msra.mxu0 %v2246
  %2716 = vmatprep.subr.bf16.mxu0 %v2251
  %2717 = vmatpush1.bf16.msra.mxu0 %v2250
  %2718 = vmatprep.subr.bf16.mxu0 %v2255
  %2719 = vmatpush1.bf16.msra.mxu0 %v2254
  %2720 = vmatprep.subr.bf16.mxu0 %v2259
  %2721 = vmatpush1.bf16.msra.mxu0 %v2258
  %2722 = vmatprep.subr.bf16.mxu0 %v2263
  %2723 = vmatpush1.bf16.msra.mxu0 %v2262
  %2724 = vmatprep.subr.bf16.mxu0 %v2267
  %2725 = vmatpush1.bf16.msra.mxu0 %v2266
  %2726 = vmatprep.subr.bf16.mxu0 %v2271
  %2727 = vmatpush1.bf16.msra.mxu0 %v2270
  %2728 = vmatprep.subr.bf16.mxu0 %v2275
  %2729 = vmatpush1.bf16.msra.mxu0 %v2274
  %2730 = vmatprep.subr.bf16.mxu0 %v2279
  %2731 = vmatpush1.bf16.msra.mxu0 %v2278
  %2732 = vmatprep.subr.bf16.mxu0 %v2283
  %2733 = vmatpush1.bf16.msra.mxu0 %v2282
  %2734 = vmatprep.subr.bf16.mxu0 %v2287
  %2735 = vmatpush1.bf16.msra.mxu0 %v2286
  %2736 = vmatprep.subr.bf16.mxu0 %v2291
  %2737 = vmatpush1.bf16.msra.mxu0 %v2290
  %2738 = vmatprep.subr.bf16.mxu0 %v2295
  %2739 = vmatpush1.bf16.msra.mxu0 %v2294
  %2740 = vmatprep.subr.bf16.mxu0 %v2299
  %2741 = vmatpush1.bf16.msra.mxu0 %v2298
  %2742 = vmatprep.subr.bf16.mxu0 %v2303
  %2743 = vmatpush1.bf16.msra.mxu0 %v2302
  %2744 = vmatprep.mubr.bf16.mxu0 %v1065
  %2745 = vmatmul.mubr.bf16.gmra.mrb[0].mxu0 %v1064
  %v2746 = vpop.f32.mrb[0].mxu0
  %v2747 = vadd.f32 %v2704, %v2746
  %v2748 = vpop.f32.mrb[0].mxu0
  %v2749 = vadd.f32 %v2706, %v2748
  %v2750 = vpop.f32.mrb[0].mxu0
  %v2751 = vadd.f32 %v2708, %v2750
  %v2752 = vpop.f32.mrb[0].mxu0
  %v2753 = vadd.f32 %v2710, %v2752
  %2754 = vdwg.mxu0
  %2755 = vmatprep.subr.bf16.mxu0 %v2307
  %2756 = vmatpush1.bf16.msra.mxu0 %v2306
  %2757 = vmatprep.subr.bf16.mxu0 %v2311
  %2758 = vmatpush1.bf16.msra.mxu0 %v2310
  %2759 = vmatprep.subr.bf16.mxu0 %v2315
  %2760 = vmatpush1.bf16.msra.mxu0 %v2314
  %2761 = vmatprep.subr.bf16.mxu0 %v2319
  %2762 = vmatpush1.bf16.msra.mxu0 %v2318
  %2763 = vmatprep.subr.bf16.mxu0 %v2323
  %2764 = vmatpush1.bf16.msra.mxu0 %v2322
  %2765 = vmatprep.subr.bf16.mxu0 %v2327
  %2766 = vmatpush1.bf16.msra.mxu0 %v2326
  %2767 = vmatprep.subr.bf16.mxu0 %v2331
  %2768 = vmatpush1.bf16.msra.mxu0 %v2330
  %2769 = vmatprep.subr.bf16.mxu0 %v2335
  %2770 = vmatpush1.bf16.msra.mxu0 %v2334
  %2771 = vmatprep.subr.bf16.mxu0 %v2339
  %2772 = vmatpush1.bf16.msra.mxu0 %v2338
  %2773 = vmatprep.subr.bf16.mxu0 %v2343
  %2774 = vmatpush1.bf16.msra.mxu0 %v2342
  %2775 = vmatprep.subr.bf16.mxu0 %v2347
  %2776 = vmatpush1.bf16.msra.mxu0 %v2346
  %2777 = vmatprep.subr.bf16.mxu0 %v2351
  %2778 = vmatpush1.bf16.msra.mxu0 %v2350
  %2779 = vmatprep.subr.bf16.mxu0 %v2355
  %2780 = vmatpush1.bf16.msra.mxu0 %v2354
  %2781 = vmatprep.subr.bf16.mxu0 %v2359
  %2782 = vmatpush1.bf16.msra.mxu0 %v2358
  %2783 = vmatprep.subr.bf16.mxu0 %v2363
  %2784 = vmatpush1.bf16.msra.mxu0 %v2362
  %2785 = vmatprep.subr.bf16.mxu0 %v2367
  %2786 = vmatpush1.bf16.msra.mxu0 %v2366
  %2787 = vmatprep.mubr.bf16.mxu0 %v1067
  %2788 = vmatmul.mubr.bf16.gmra.mrb[0].mxu0 %v1066
  %v2789 = vpop.f32.mrb[0].mxu0
  %v2790 = vadd.f32 %v2747, %v2789
  %v2791 = vpop.f32.mrb[0].mxu0
  %v2792 = vadd.f32 %v2749, %v2791
  %v2793 = vpop.f32.mrb[0].mxu0
  %v2794 = vadd.f32 %v2751, %v2793
  %v2795 = vpop.f32.mrb[0].mxu0
  %v2796 = vadd.f32 %v2753, %v2795
  %2797 = vdwg.mxu0
  %2798 = vmatprep.subr.bf16.mxu0 %v2117
  %2799 = vmatpush1.bf16.msra.mxu0 %v2116
  %2800 = vmatprep.subr.bf16.mxu0 %v2121
  %2801 = vmatpush1.bf16.msra.mxu0 %v2120
  %2802 = vmatprep.subr.bf16.mxu0 %v2125
  %2803 = vmatpush1.bf16.msra.mxu0 %v2124
  %2804 = vmatprep.subr.bf16.mxu0 %v2129
  %2805 = vmatpush1.bf16.msra.mxu0 %v2128
  %2806 = vmatprep.subr.bf16.mxu0 %v2133
  %2807 = vmatpush1.bf16.msra.mxu0 %v2132
  %2808 = vmatprep.subr.bf16.mxu0 %v2137
  %2809 = vmatpush1.bf16.msra.mxu0 %v2136
  %2810 = vmatprep.subr.bf16.mxu0 %v2141
  %2811 = vmatpush1.bf16.msra.mxu0 %v2140
  %2812 = vmatprep.subr.bf16.mxu0 %v2145
  %2813 = vmatpush1.bf16.msra.mxu0 %v2144
  %2814 = vmatprep.subr.bf16.mxu0 %v2149
  %2815 = vmatpush1.bf16.msra.mxu0 %v2148
  %2816 = vmatprep.subr.bf16.mxu0 %v2153
  %2817 = vmatpush1.bf16.msra.mxu0 %v2152
  %2818 = vmatprep.subr.bf16.mxu0 %v2157
  %2819 = vmatpush1.bf16.msra.mxu0 %v2156
  %2820 = vmatprep.subr.bf16.mxu0 %v2161
  %2821 = vmatpush1.bf16.msra.mxu0 %v2160
  %2822 = vmatprep.subr.bf16.mxu0 %v2165
  %2823 = vmatpush1.bf16.msra.mxu0 %v2164
  %2824 = vmatprep.subr.bf16.mxu0 %v2169
  %2825 = vmatpush1.bf16.msra.mxu0 %v2168
  %2826 = vmatprep.subr.bf16.mxu0 %v2173
  %2827 = vmatpush1.bf16.msra.mxu0 %v2172
  %2828 = vmatprep.subr.bf16.mxu0 %v2177
  %2829 = vmatpush1.bf16.msra.mxu0 %v2176
  %2830 = vmatprep.mubr.bf16.mxu0 %v1061
  %2831 = vmatmul.mubr.bf16.gmra.mrb[0].mxu0 %v1060
  %v2832 = vpop.f32.mrb[0].mxu0
  %v2833 = vadd.f32 %v1337, %v2832
  %v2834 = vpop.f32.mrb[0].mxu0
  %v2835 = vadd.f32 %v1341, %v2834
  %v2836 = vpop.f32.mrb[0].mxu0
  %v2837 = vadd.f32 %v1337, %v2836
  %v2838 = vpop.f32.mrb[0].mxu0
  %v2839 = vadd.f32 %v1341, %v2838
  %2840 = vdwg.mxu0
  %2841 = vmatprep.subr.bf16.mxu0 %v2181
  %2842 = vmatpush1.bf16.msra.mxu0 %v2180
  %2843 = vmatprep.subr.bf16.mxu0 %v2185
  %2844 = vmatpush1.bf16.msra.mxu0 %v2184
  %2845 = vmatprep.subr.bf16.mxu0 %v2189
  %2846 = vmatpush1.bf16.msra.mxu0 %v2188
  %2847 = vmatprep.subr.bf16.mxu0 %v2193
  %2848 = vmatpush1.bf16.msra.mxu0 %v2192
  %2849 = vmatprep.subr.bf16.mxu0 %v2197
  %2850 = vmatpush1.bf16.msra.mxu0 %v2196
  %2851 = vmatprep.subr.bf16.mxu0 %v2201
  %2852 = vmatpush1.bf16.msra.mxu0 %v2200
  %2853 = vmatprep.subr.bf16.mxu0 %v2205
  %2854 = vmatpush1.bf16.msra.mxu0 %v2204
  %2855 = vmatprep.subr.bf16.mxu0 %v2209
  %2856 = vmatpush1.bf16.msra.mxu0 %v2208
  %2857 = vmatprep.subr.bf16.mxu0 %v2213
  %2858 = vmatpush1.bf16.msra.mxu0 %v2212
  %2859 = vmatprep.subr.bf16.mxu0 %v2217
  %2860 = vmatpush1.bf16.msra.mxu0 %v2216
  %2861 = vmatprep.subr.bf16.mxu0 %v2221
  %2862 = vmatpush1.bf16.msra.mxu0 %v2220
  %2863 = vmatprep.subr.bf16.mxu0 %v2225
  %2864 = vmatpush1.bf16.msra.mxu0 %v2224
  %2865 = vmatprep.subr.bf16.mxu0 %v2229
  %2866 = vmatpush1.bf16.msra.mxu0 %v2228
  %2867 = vmatprep.subr.bf16.mxu0 %v2233
  %2868 = vmatpush1.bf16.msra.mxu0 %v2232
  %2869 = vmatprep.subr.bf16.mxu0 %v2237
  %2870 = vmatpush1.bf16.msra.mxu0 %v2236
  %2871 = vmatprep.subr.bf16.mxu0 %v2241
  %2872 = vmatpush1.bf16.msra.mxu0 %v2240
  %2873 = vmatprep.mubr.bf16.mxu0 %v1063
  %2874 = vmatmul.mubr.bf16.gmra.mrb[0].mxu0 %v1062
  %v2875 = vpop.f32.mrb[0].mxu0
  %v2876 = vadd.f32 %v2833, %v2875
  %v2877 = vpop.f32.mrb[0].mxu0
  %v2878 = vadd.f32 %v2835, %v2877
  %v2879 = vpop.f32.mrb[0].mxu0
  %v2880 = vadd.f32 %v2837, %v2879
  %v2881 = vpop.f32.mrb[0].mxu0
  %v2882 = vadd.f32 %v2839, %v2881
  %2883 = vdwg.mxu0
  %2884 = vmatprep.subr.bf16.mxu0 %v2245
  %2885 = vmatpush1.bf16.msra.mxu0 %v2244
  %2886 = vmatprep.subr.bf16.mxu0 %v2249
  %2887 = vmatpush1.bf16.msra.mxu0 %v2248
  %2888 = vmatprep.subr.bf16.mxu0 %v2253
  %2889 = vmatpush1.bf16.msra.mxu0 %v2252
  %2890 = vmatprep.subr.bf16.mxu0 %v2257
  %2891 = vmatpush1.bf16.msra.mxu0 %v2256
  %2892 = vmatprep.subr.bf16.mxu0 %v2261
  %2893 = vmatpush1.bf16.msra.mxu0 %v2260
  %2894 = vmatprep.subr.bf16.mxu0 %v2265
  %2895 = vmatpush1.bf16.msra.mxu0 %v2264
  %2896 = vmatprep.subr.bf16.mxu0 %v2269
  %2897 = vmatpush1.bf16.msra.mxu0 %v2268
  %2898 = vmatprep.subr.bf16.mxu0 %v2273
  %2899 = vmatpush1.bf16.msra.mxu0 %v2272
  %2900 = vmatprep.subr.bf16.mxu0 %v2277
  %2901 = vmatpush1.bf16.msra.mxu0 %v2276
  %2902 = vmatprep.subr.bf16.mxu0 %v2281
  %2903 = vmatpush1.bf16.msra.mxu0 %v2280
  %2904 = vmatprep.subr.bf16.mxu0 %v2285
  %2905 = vmatpush1.bf16.msra.mxu0 %v2284
  %2906 = vmatprep.subr.bf16.mxu0 %v2289
  %2907 = vmatpush1.bf16.msra.mxu0 %v2288
  %2908 = vmatprep.subr.bf16.mxu0 %v2293
  %2909 = vmatpush1.bf16.msra.mxu0 %v2292
  %2910 = vmatprep.subr.bf16.mxu0 %v2297
  %2911 = vmatpush1.bf16.msra.mxu0 %v2296
  %2912 = vmatprep.subr.bf16.mxu0 %v2301
  %2913 = vmatpush1.bf16.msra.mxu0 %v2300
  %2914 = vmatprep.subr.bf16.mxu0 %v2305
  %2915 = vmatpush1.bf16.msra.mxu0 %v2304
  %2916 = vmatprep.mubr.bf16.mxu0 %v1065
  %2917 = vmatmul.mubr.bf16.gmra.mrb[0].mxu0 %v1064
  %v2918 = vpop.f32.mrb[0].mxu0
  %v2919 = vadd.f32 %v2876, %v2918
  %v2920 = vpop.f32.mrb[0].mxu0
  %v2921 = vadd.f32 %v2878, %v2920
  %v2922 = vpop.f32.mrb[0].mxu0
  %v2923 = vadd.f32 %v2880, %v2922
  %v2924 = vpop.f32.mrb[0].mxu0
  %v2925 = vadd.f32 %v2882, %v2924
  %2926 = vdwg.mxu0
  %2927 = vmatprep.subr.bf16.mxu0 %v2309
  %2928 = vmatpush1.bf16.msra.mxu0 %v2308
  %2929 = vmatprep.subr.bf16.mxu0 %v2313
  %2930 = vmatpush1.bf16.msra.mxu0 %v2312
  %2931 = vmatprep.subr.bf16.mxu0 %v2317
  %2932 = vmatpush1.bf16.msra.mxu0 %v2316
  %2933 = vmatprep.subr.bf16.mxu0 %v2321
  %2934 = vmatpush1.bf16.msra.mxu0 %v2320
  %2935 = vmatprep.subr.bf16.mxu0 %v2325
  %2936 = vmatpush1.bf16.msra.mxu0 %v2324
  %2937 = vmatprep.subr.bf16.mxu0 %v2329
  %2938 = vmatpush1.bf16.msra.mxu0 %v2328
  %2939 = vmatprep.subr.bf16.mxu0 %v2333
  %2940 = vmatpush1.bf16.msra.mxu0 %v2332
  %2941 = vmatprep.subr.bf16.mxu0 %v2337
  %2942 = vmatpush1.bf16.msra.mxu0 %v2336
  %2943 = vmatprep.subr.bf16.mxu0 %v2341
  %2944 = vmatpush1.bf16.msra.mxu0 %v2340
  %2945 = vmatprep.subr.bf16.mxu0 %v2345
  %2946 = vmatpush1.bf16.msra.mxu0 %v2344
  %2947 = vmatprep.subr.bf16.mxu0 %v2349
  %2948 = vmatpush1.bf16.msra.mxu0 %v2348
  %2949 = vmatprep.subr.bf16.mxu0 %v2353
  %2950 = vmatpush1.bf16.msra.mxu0 %v2352
  %2951 = vmatprep.subr.bf16.mxu0 %v2357
  %2952 = vmatpush1.bf16.msra.mxu0 %v2356
  %2953 = vmatprep.subr.bf16.mxu0 %v2361
  %2954 = vmatpush1.bf16.msra.mxu0 %v2360
  %2955 = vmatprep.subr.bf16.mxu0 %v2365
  %2956 = vmatpush1.bf16.msra.mxu0 %v2364
  %2957 = vmatprep.subr.bf16.mxu0 %v2369
  %2958 = vmatpush1.bf16.msra.mxu0 %v2368
  %2959 = vmatprep.mubr.bf16.mxu0 %v1067
  %2960 = vmatmul.mubr.bf16.gmra.mrb[0].mxu0 %v1066
  %v2961 = vpop.f32.mrb[0].mxu0
  %v2962 = vadd.f32 %v2919, %v2961
  %v2963 = vpop.f32.mrb[0].mxu0
  %v2964 = vadd.f32 %v2921, %v2963
  %v2965 = vpop.f32.mrb[0].mxu0
  %v2966 = vadd.f32 %v2923, %v2965
  %v2967 = vpop.f32.mrb[0].mxu0
  %v2968 = vadd.f32 %v2925, %v2967
  %2969 = vdwg.mxu0
  %v2970 = vmul.f32 %v2790, 0.01
  %v2971 = vmul.f32 %v2792, 0.01
  %v2972 = vmul.f32 %v2962, 0.01
  %v2973 = vmul.f32 %v2964, 0.01
  %v2974 = vmul.f32 %v2794, 0.01
  %v2975 = vmul.f32 %v2796, 0.01
  %v2976 = vmul.f32 %v2966, 0.01
  %v2977 = vmul.f32 %v2968, 0.01
  %v2978 = vmax.f32 %v2790, %v2970
  %v2979 = vmax.f32 %v2792, %v2971
  %v2980 = vmax.f32 %v2962, %v2972
  %v2981 = vmax.f32 %v2964, %v2973
  %v2982 = vmax.f32 %v2794, %v2974
  %v2983 = vmax.f32 %v2796, %v2975
  %v2984 = vmax.f32 %v2966, %v2976
  %v2985 = vmax.f32 %v2968, %v2977
  %v2986 = vpack.c.bf16 %v2982, %v2978
  %v2987 = vpack.c.bf16 %v2983, %v2979
  %v2988 = vpack.c.bf16 %v2984, %v2980
  %v2989 = vpack.c.bf16 %v2985, %v2981
  %v2990 = vld [vmem:[%s5] sm:$0xff]
  %v2991 = vld [vmem:[%s5 + $0x8] sm:$0xff]
  %v2992 = vld [vmem:[%s5 + $0x10] sm:$0xff]
  %v2993 = vld [vmem:[%s5 + $0x18] sm:$0xff]
  %v2994 = vld [vmem:[%s5 + $0x20] sm:$0xff]
  %v2995 = vld [vmem:[%s5 + $0x28] sm:$0xff]
  %v2996 = vld [vmem:[%s5 + $0x30] sm:$0xff]
  %v2997 = vld [vmem:[%s5 + $0x38] sm:$0xff]
  %v2998 = vld [vmem:[%s5 + $0x40] sm:$0xff]
  %v2999 = vld [vmem:[%s5 + $0x48] sm:$0xff]
  %v3000 = vld [vmem:[%s5 + $0x50] sm:$0xff]
  %v3001 = vld [vmem:[%s5 + $0x58] sm:$0xff]
  %v3002 = vld [vmem:[%s5 + $0x60] sm:$0xff]
  %v3003 = vld [vmem:[%s5 + $0x68] sm:$0xff]
  %v3004 = vld [vmem:[%s5 + $0x70] sm:$0xff]
  %v3005 = vld [vmem:[%s5 + $0x78] sm:$0xff]
  %v3006 = vld [vmem:[%s5 + $0x80] sm:$0xff]
  %v3007 = vld [vmem:[%s5 + $0x88] sm:$0xff]
  %v3008 = vld [vmem:[%s5 + $0x90] sm:$0xff]
  %v3009 = vld [vmem:[%s5 + $0x98] sm:$0xff]
  %v3010 = vld [vmem:[%s5 + $0xa0] sm:$0xff]
  %v3011 = vld [vmem:[%s5 + $0xa8] sm:$0xff]
  %v3012 = vld [vmem:[%s5 + $0xb0] sm:$0xff]
  %v3013 = vld [vmem:[%s5 + $0xb8] sm:$0xff]
  %v3014 = vld [vmem:[%s5 + $0xc0] sm:$0xff]
  %v3015 = vld [vmem:[%s5 + $0xc8] sm:$0xff]
  %v3016 = vld [vmem:[%s5 + $0xd0] sm:$0xff]
  %v3017 = vld [vmem:[%s5 + $0xd8] sm:$0xff]
  %v3018 = vld [vmem:[%s5 + $0xe0] sm:$0xff]
  %v3019 = vld [vmem:[%s5 + $0xe8] sm:$0xff]
  %v3020 = vld [vmem:[%s5 + $0xf0] sm:$0xff]
  %v3021 = vld [vmem:[%s5 + $0xf8] sm:$0xff]
  %v3022 = vld [vmem:[%s5 + $0x100] sm:$0xff]
  %v3023 = vld [vmem:[%s5 + $0x108] sm:$0xff]
  %v3024 = vld [vmem:[%s5 + $0x110] sm:$0xff]
  %v3025 = vld [vmem:[%s5 + $0x118] sm:$0xff]
  %v3026 = vld [vmem:[%s5 + $0x120] sm:$0xff]
  %v3027 = vld [vmem:[%s5 + $0x128] sm:$0xff]
  %v3028 = vld [vmem:[%s5 + $0x130] sm:$0xff]
  %v3029 = vld [vmem:[%s5 + $0x138] sm:$0xff]
  %v3030 = vld [vmem:[%s5 + $0x140] sm:$0xff]
  %v3031 = vld [vmem:[%s5 + $0x148] sm:$0xff]
  %v3032 = vld [vmem:[%s5 + $0x150] sm:$0xff]
  %v3033 = vld [vmem:[%s5 + $0x158] sm:$0xff]
  %v3034 = vld [vmem:[%s5 + $0x160] sm:$0xff]
  %v3035 = vld [vmem:[%s5 + $0x168] sm:$0xff]
  %v3036 = vld [vmem:[%s5 + $0x170] sm:$0xff]
  %v3037 = vld [vmem:[%s5 + $0x178] sm:$0xff]
  %v3038 = vld [vmem:[%s5 + $0x180] sm:$0xff]
  %v3039 = vld [vmem:[%s5 + $0x188] sm:$0xff]
  %v3040 = vld [vmem:[%s5 + $0x190] sm:$0xff]
  %v3041 = vld [vmem:[%s5 + $0x198] sm:$0xff]
  %v3042 = vld [vmem:[%s5 + $0x1a0] sm:$0xff]
  %v3043 = vld [vmem:[%s5 + $0x1a8] sm:$0xff]
  %v3044 = vld [vmem:[%s5 + $0x1b0] sm:$0xff]
  %v3045 = vld [vmem:[%s5 + $0x1b8] sm:$0xff]
  %v3046 = vld [vmem:[%s5 + $0x1c0] sm:$0xff]
  %v3047 = vld [vmem:[%s5 + $0x1c8] sm:$0xff]
  %v3048 = vld [vmem:[%s5 + $0x1d0] sm:$0xff]
  %v3049 = vld [vmem:[%s5 + $0x1d8] sm:$0xff]
  %v3050 = vld [vmem:[%s5 + $0x1e0] sm:$0xff]
  %v3051 = vld [vmem:[%s5 + $0x1e8] sm:$0xff]
  %v3052 = vld [vmem:[%s5 + $0x1f0] sm:$0xff]
  %v3053 = vld [vmem:[%s5 + $0x1f8] sm:$0xff]
  %v3054 = vld [vmem:[%s6] sm:$0x3]
  %v3056 = vlaneseq
  %v3057 = vshrl.u32 %v3056, 7
  %v3058 = vsub.s32 0, %v3057
  %v3059 = vrot.slane %v3054, %v3058
  %v3060 = vlaneseq
  %v3061 = vshrl.u32 %v3060, 7
  %v3062 = vsub.s32 1, %v3061
  %v3063 = vrot.slane %v3054, %v3062
  %v3130 = vunpack.c.l.b16 %v2990
  %v3131 = vunpack.c.h.b16 %v2990
  %v3132 = vunpack.c.l.b16 %v2991
  %v3133 = vunpack.c.h.b16 %v2991
  %v3134 = vunpack.c.l.b16 %v2992
  %v3135 = vunpack.c.h.b16 %v2992
  %v3136 = vunpack.c.l.b16 %v2993
  %v3137 = vunpack.c.h.b16 %v2993
  %v3138 = vunpack.c.l.b16 %v2994
  %v3139 = vunpack.c.h.b16 %v2994
  %v3140 = vunpack.c.l.b16 %v2995
  %v3141 = vunpack.c.h.b16 %v2995
  %v3142 = vunpack.c.l.b16 %v2996
  %v3143 = vunpack.c.h.b16 %v2996
  %v3144 = vunpack.c.l.b16 %v2997
  %v3145 = vunpack.c.h.b16 %v2997
  %v3146 = vunpack.c.l.b16 %v2998
  %v3147 = vunpack.c.h.b16 %v2998
  %v3148 = vunpack.c.l.b16 %v2999
  %v3149 = vunpack.c.h.b16 %v2999
  %v3150 = vunpack.c.l.b16 %v3000
  %v3151 = vunpack.c.h.b16 %v3000
  %v3152 = vunpack.c.l.b16 %v3001
  %v3153 = vunpack.c.h.b16 %v3001
  %v3154 = vunpack.c.l.b16 %v3002
  %v3155 = vunpack.c.h.b16 %v3002
  %v3156 = vunpack.c.l.b16 %v3003
  %v3157 = vunpack.c.h.b16 %v3003
  %v3158 = vunpack.c.l.b16 %v3004
  %v3159 = vunpack.c.h.b16 %v3004
  %v3160 = vunpack.c.l.b16 %v3005
  %v3161 = vunpack.c.h.b16 %v3005
  %v3162 = vunpack.c.l.b16 %v3006
  %v3163 = vunpack.c.h.b16 %v3006
  %v3164 = vunpack.c.l.b16 %v3007
  %v3165 = vunpack.c.h.b16 %v3007
  %v3166 = vunpack.c.l.b16 %v3008
  %v3167 = vunpack.c.h.b16 %v3008
  %v3168 = vunpack.c.l.b16 %v3009
  %v3169 = vunpack.c.h.b16 %v3009
  %v3170 = vunpack.c.l.b16 %v3010
  %v3171 = vunpack.c.h.b16 %v3010
  %v3172 = vunpack.c.l.b16 %v3011
  %v3173 = vunpack.c.h.b16 %v3011
  %v3174 = vunpack.c.l.b16 %v3012
  %v3175 = vunpack.c.h.b16 %v3012
  %v3176 = vunpack.c.l.b16 %v3013
  %v3177 = vunpack.c.h.b16 %v3013
  %v3178 = vunpack.c.l.b16 %v3014
  %v3179 = vunpack.c.h.b16 %v3014
  %v3180 = vunpack.c.l.b16 %v3015
  %v3181 = vunpack.c.h.b16 %v3015
  %v3182 = vunpack.c.l.b16 %v3016
  %v3183 = vunpack.c.h.b16 %v3016
  %v3184 = vunpack.c.l.b16 %v3017
  %v3185 = vunpack.c.h.b16 %v3017
  %v3186 = vunpack.c.l.b16 %v3018
  %v3187 = vunpack.c.h.b16 %v3018
  %v3188 = vunpack.c.l.b16 %v3019
  %v3189 = vunpack.c.h.b16 %v3019
  %v3190 = vunpack.c.l.b16 %v3020
  %v3191 = vunpack.c.h.b16 %v3020
  %v3192 = vunpack.c.l.b16 %v3021
  %v3193 = vunpack.c.h.b16 %v3021
  %v3194 = vunpack.c.l.b16 %v3022
  %v3195 = vunpack.c.h.b16 %v3022
  %v3196 = vunpack.c.l.b16 %v3023
  %v3197 = vunpack.c.h.b16 %v3023
  %v3198 = vunpack.c.l.b16 %v3024
  %v3199 = vunpack.c.h.b16 %v3024
  %v3200 = vunpack.c.l.b16 %v3025
  %v3201 = vunpack.c.h.b16 %v3025
  %v3202 = vunpack.c.l.b16 %v3026
  %v3203 = vunpack.c.h.b16 %v3026
  %v3204 = vunpack.c.l.b16 %v3027
  %v3205 = vunpack.c.h.b16 %v3027
  %v3206 = vunpack.c.l.b16 %v3028
  %v3207 = vunpack.c.h.b16 %v3028
  %v3208 = vunpack.c.l.b16 %v3029
  %v3209 = vunpack.c.h.b16 %v3029
  %v3210 = vunpack.c.l.b16 %v3030
  %v3211 = vunpack.c.h.b16 %v3030
  %v3212 = vunpack.c.l.b16 %v3031
  %v3213 = vunpack.c.h.b16 %v3031
  %v3214 = vunpack.c.l.b16 %v3032
  %v3215 = vunpack.c.h.b16 %v3032
  %v3216 = vunpack.c.l.b16 %v3033
  %v3217 = vunpack.c.h.b16 %v3033
  %v3218 = vunpack.c.l.b16 %v3034
  %v3219 = vunpack.c.h.b16 %v3034
  %v3220 = vunpack.c.l.b16 %v3035
  %v3221 = vunpack.c.h.b16 %v3035
  %v3222 = vunpack.c.l.b16 %v3036
  %v3223 = vunpack.c.h.b16 %v3036
  %v3224 = vunpack.c.l.b16 %v3037
  %v3225 = vunpack.c.h.b16 %v3037
  %v3226 = vunpack.c.l.b16 %v3038
  %v3227 = vunpack.c.h.b16 %v3038
  %v3228 = vunpack.c.l.b16 %v3039
  %v3229 = vunpack.c.h.b16 %v3039
  %v3230 = vunpack.c.l.b16 %v3040
  %v3231 = vunpack.c.h.b16 %v3040
  %v3232 = vunpack.c.l.b16 %v3041
  %v3233 = vunpack.c.h.b16 %v3041
  %v3234 = vunpack.c.l.b16 %v3042
  %v3235 = vunpack.c.h.b16 %v3042
  %v3236 = vunpack.c.l.b16 %v3043
  %v3237 = vunpack.c.h.b16 %v3043
  %v3238 = vunpack.c.l.b16 %v3044
  %v3239 = vunpack.c.h.b16 %v3044
  %v3240 = vunpack.c.l.b16 %v3045
  %v3241 = vunpack.c.h.b16 %v3045
  %v3242 = vunpack.c.l.b16 %v3046
  %v3243 = vunpack.c.h.b16 %v3046
  %v3244 = vunpack.c.l.b16 %v3047
  %v3245 = vunpack.c.h.b16 %v3047
  %v3246 = vunpack.c.l.b16 %v3048
  %v3247 = vunpack.c.h.b16 %v3048
  %v3248 = vunpack.c.l.b16 %v3049
  %v3249 = vunpack.c.h.b16 %v3049
  %v3250 = vunpack.c.l.b16 %v3050
  %v3251 = vunpack.c.h.b16 %v3050
  %v3252 = vunpack.c.l.b16 %v3051
  %v3253 = vunpack.c.h.b16 %v3051
  %v3254 = vunpack.c.l.b16 %v3052
  %v3255 = vunpack.c.h.b16 %v3052
  %v3256 = vunpack.c.l.b16 %v3053
  %v3257 = vunpack.c.h.b16 %v3053
  %v3258 = vpack.c.b16 %v3132, %v3130
  %v3259 = vpack.c.b16 %v3133, %v3131
  %v3260 = vpack.c.b16 %v3136, %v3134
  %v3261 = vpack.c.b16 %v3137, %v3135
  %v3262 = vpack.c.b16 %v3140, %v3138
  %v3263 = vpack.c.b16 %v3141, %v3139
  %v3264 = vpack.c.b16 %v3144, %v3142
  %v3265 = vpack.c.b16 %v3145, %v3143
  %v3266 = vpack.c.b16 %v3148, %v3146
  %v3267 = vpack.c.b16 %v3149, %v3147
  %v3268 = vpack.c.b16 %v3152, %v3150
  %v3269 = vpack.c.b16 %v3153, %v3151
  %v3270 = vpack.c.b16 %v3156, %v3154
  %v3271 = vpack.c.b16 %v3157, %v3155
  %v3272 = vpack.c.b16 %v3160, %v3158
  %v3273 = vpack.c.b16 %v3161, %v3159
  %v3274 = vpack.c.b16 %v3164, %v3162
  %v3275 = vpack.c.b16 %v3165, %v3163
  %v3276 = vpack.c.b16 %v3168, %v3166
  %v3277 = vpack.c.b16 %v3169, %v3167
  %v3278 = vpack.c.b16 %v3172, %v3170
  %v3279 = vpack.c.b16 %v3173, %v3171
  %v3280 = vpack.c.b16 %v3176, %v3174
  %v3281 = vpack.c.b16 %v3177, %v3175
  %v3282 = vpack.c.b16 %v3180, %v3178
  %v3283 = vpack.c.b16 %v3181, %v3179
  %v3284 = vpack.c.b16 %v3184, %v3182
  %v3285 = vpack.c.b16 %v3185, %v3183
  %v3286 = vpack.c.b16 %v3188, %v3186
  %v3287 = vpack.c.b16 %v3189, %v3187
  %v3288 = vpack.c.b16 %v3192, %v3190
  %v3289 = vpack.c.b16 %v3193, %v3191
  %v3290 = vpack.c.b16 %v3196, %v3194
  %v3291 = vpack.c.b16 %v3197, %v3195
  %v3292 = vpack.c.b16 %v3200, %v3198
  %v3293 = vpack.c.b16 %v3201, %v3199
  %v3294 = vpack.c.b16 %v3204, %v3202
  %v3295 = vpack.c.b16 %v3205, %v3203
  %v3296 = vpack.c.b16 %v3208, %v3206
  %v3297 = vpack.c.b16 %v3209, %v3207
  %v3298 = vpack.c.b16 %v3212, %v3210
  %v3299 = vpack.c.b16 %v3213, %v3211
  %v3300 = vpack.c.b16 %v3216, %v3214
  %v3301 = vpack.c.b16 %v3217, %v3215
  %v3302 = vpack.c.b16 %v3220, %v3218
  %v3303 = vpack.c.b16 %v3221, %v3219
  %v3304 = vpack.c.b16 %v3224, %v3222
  %v3305 = vpack.c.b16 %v3225, %v3223
  %v3306 = vpack.c.b16 %v3228, %v3226
  %v3307 = vpack.c.b16 %v3229, %v3227
  %v3308 = vpack.c.b16 %v3232, %v3230
  %v3309 = vpack.c.b16 %v3233, %v3231
  %v3310 = vpack.c.b16 %v3236, %v3234
  %v3311 = vpack.c.b16 %v3237, %v3235
  %v3312 = vpack.c.b16 %v3240, %v3238
  %v3313 = vpack.c.b16 %v3241, %v3239
  %v3314 = vpack.c.b16 %v3244, %v3242
  %v3315 = vpack.c.b16 %v3245, %v3243
  %v3316 = vpack.c.b16 %v3248, %v3246
  %v3317 = vpack.c.b16 %v3249, %v3247
  %v3318 = vpack.c.b16 %v3252, %v3250
  %v3319 = vpack.c.b16 %v3253, %v3251
  %v3320 = vpack.c.b16 %v3256, %v3254
  %v3321 = vpack.c.b16 %v3257, %v3255
  %3386 = vmatprep.subr.bf16.mxu0 %v3259
  %3387 = vmatpush1.bf16.msra.mxu0 %v3258
  %3388 = vmatprep.subr.bf16.mxu0 %v3261
  %3389 = vmatpush1.bf16.msra.mxu0 %v3260
  %3390 = vmatprep.subr.bf16.mxu0 %v3263
  %3391 = vmatpush1.bf16.msra.mxu0 %v3262
  %3392 = vmatprep.subr.bf16.mxu0 %v3265
  %3393 = vmatpush1.bf16.msra.mxu0 %v3264
  %3394 = vmatprep.subr.bf16.mxu0 %v3267
  %3395 = vmatpush1.bf16.msra.mxu0 %v3266
  %3396 = vmatprep.subr.bf16.mxu0 %v3269
  %3397 = vmatpush1.bf16.msra.mxu0 %v3268
  %3398 = vmatprep.subr.bf16.mxu0 %v3271
  %3399 = vmatpush1.bf16.msra.mxu0 %v3270
  %3400 = vmatprep.subr.bf16.mxu0 %v3273
  %3401 = vmatpush1.bf16.msra.mxu0 %v3272
  %3402 = vmatprep.subr.bf16.mxu0 %v3275
  %3403 = vmatpush1.bf16.msra.mxu0 %v3274
  %3404 = vmatprep.subr.bf16.mxu0 %v3277
  %3405 = vmatpush1.bf16.msra.mxu0 %v3276
  %3406 = vmatprep.subr.bf16.mxu0 %v3279
  %3407 = vmatpush1.bf16.msra.mxu0 %v3278
  %3408 = vmatprep.subr.bf16.mxu0 %v3281
  %3409 = vmatpush1.bf16.msra.mxu0 %v3280
  %3410 = vmatprep.subr.bf16.mxu0 %v3283
  %3411 = vmatpush1.bf16.msra.mxu0 %v3282
  %3412 = vmatprep.subr.bf16.mxu0 %v3285
  %3413 = vmatpush1.bf16.msra.mxu0 %v3284
  %3414 = vmatprep.subr.bf16.mxu0 %v3287
  %3415 = vmatpush1.bf16.msra.mxu0 %v3286
  %3416 = vmatprep.subr.bf16.mxu0 %v3289
  %3417 = vmatpush1.bf16.msra.mxu0 %v3288
  %3418 = vmatprep.mubr.bf16.mxu0 %v2987
  %3419 = vmatmul.mubr.bf16.gmra.mrb[0].mxu0 %v2986
  %v3420 = vpop.f32.mrb[0].mxu0
  %v3421 = vadd.f32 %v3059, %v3420
  %v3422 = vpop.f32.mrb[0].mxu0
  %v3423 = vadd.f32 %v3063, %v3422
  %v3424 = vpop.f32.mrb[0].mxu0
  %v3425 = vadd.f32 %v3059, %v3424
  %v3426 = vpop.f32.mrb[0].mxu0
  %v3427 = vadd.f32 %v3063, %v3426
  %3428 = vdwg.mxu0
  %3429 = vmatprep.subr.bf16.mxu0 %v3291
  %3430 = vmatpush1.bf16.msra.mxu0 %v3290
  %3431 = vmatprep.subr.bf16.mxu0 %v3293
  %3432 = vmatpush1.bf16.msra.mxu0 %v3292
  %3433 = vmatprep.subr.bf16.mxu0 %v3295
  %3434 = vmatpush1.bf16.msra.mxu0 %v3294
  %3435 = vmatprep.subr.bf16.mxu0 %v3297
  %3436 = vmatpush1.bf16.msra.mxu0 %v3296
  %3437 = vmatprep.subr.bf16.mxu0 %v3299
  %3438 = vmatpush1.bf16.msra.mxu0 %v3298
  %3439 = vmatprep.subr.bf16.mxu0 %v3301
  %3440 = vmatpush1.bf16.msra.mxu0 %v3300
  %3441 = vmatprep.subr.bf16.mxu0 %v3303
  %3442 = vmatpush1.bf16.msra.mxu0 %v3302
  %3443 = vmatprep.subr.bf16.mxu0 %v3305
  %3444 = vmatpush1.bf16.msra.mxu0 %v3304
  %3445 = vmatprep.subr.bf16.mxu0 %v3307
  %3446 = vmatpush1.bf16.msra.mxu0 %v3306
  %3447 = vmatprep.subr.bf16.mxu0 %v3309
  %3448 = vmatpush1.bf16.msra.mxu0 %v3308
  %3449 = vmatprep.subr.bf16.mxu0 %v3311
  %3450 = vmatpush1.bf16.msra.mxu0 %v3310
  %3451 = vmatprep.subr.bf16.mxu0 %v3313
  %3452 = vmatpush1.bf16.msra.mxu0 %v3312
  %3453 = vmatprep.subr.bf16.mxu0 %v3315
  %3454 = vmatpush1.bf16.msra.mxu0 %v3314
  %3455 = vmatprep.subr.bf16.mxu0 %v3317
  %3456 = vmatpush1.bf16.msra.mxu0 %v3316
  %3457 = vmatprep.subr.bf16.mxu0 %v3319
  %3458 = vmatpush1.bf16.msra.mxu0 %v3318
  %3459 = vmatprep.subr.bf16.mxu0 %v3321
  %3460 = vmatpush1.bf16.msra.mxu0 %v3320
  %3461 = vmatprep.mubr.bf16.mxu0 %v2989
  %3462 = vmatmul.mubr.bf16.gmra.mrb[0].mxu0 %v2988
  %v3463 = vpop.f32.mrb[0].mxu0
  %v3464 = vadd.f32 %v3421, %v3463
  %v3465 = vpop.f32.mrb[0].mxu0
  %v3466 = vadd.f32 %v3423, %v3465
  %v3467 = vpop.f32.mrb[0].mxu0
  %v3468 = vadd.f32 %v3425, %v3467
  %v3469 = vpop.f32.mrb[0].mxu0
  %v3470 = vadd.f32 %v3427, %v3469
  %3471 = vdwg.mxu0
  %v3472 = vmul.f32 %v3464, 0.01
  %v3473 = vmul.f32 %v3466, 0.01
  %v3474 = vmul.f32 %v3468, 0.01
  %v3475 = vmul.f32 %v3470, 0.01
  %v3476 = vmax.f32 %v3464, %v3472
  %v3477 = vmax.f32 %v3466, %v3473
  %v3478 = vmax.f32 %v3468, %v3474
  %v3479 = vmax.f32 %v3470, %v3475
  %v3480 = vld [vmem:[%s7] sm:$0x3]
  %v3481 = vld [vmem:[#allocation2] sm:$0x1]
  %3483 = vset.pattern.permute.xlu0 0
  %3484 = vperm.xlu0 %3483, %v3481
  %v3485 = vpop.permute.xlu0 %3484
  %v3487 = vlaneseq
  %v3488 = vshrl.u32 %v3487, 7
  %v3489 = vsub.s32 0, %v3488
  %v3490 = vrot.slane %v3485, %v3489
  %v3492 = vlaneseq
  %v3493 = vshrl.u32 %v3492, 7
  %v3494 = vsub.s32 0, %v3493
  %v3495 = vrot.slane %v3480, %v3494
  %v3496 = vlaneseq
  %v3497 = vshrl.u32 %v3496, 7
  %v3498 = vsub.s32 1, %v3497
  %v3499 = vrot.slane %v3480, %v3498
  %3502 = vmatprep.subr.mxu0 %v3477
  %3503 = vmatpush1.xpose.msra.mxu0 %v3476
  %3504 = vmatprep.subr.mxu0 %v3479
  %3505 = vmatpush1.xpose.msra.mxu0 %v3478
  %3506 = vmatprep.subr.mxu0 0.0
  %3507 = vmatpush1.xpose.msra.mxu0 0.0
  %3508 = vmatprep.subr.mxu0 0.0
  %3509 = vmatpush1.xpose.msra.mxu0 0.0
  %3510 = vmatprep.subr.mxu0 0.0
  %3511 = vmatpush1.xpose.msra.mxu0 0.0
  %3512 = vmatprep.subr.mxu0 0.0
  %3513 = vmatpush1.xpose.msra.mxu0 0.0
  %3514 = vmatprep.subr.mxu0 0.0
  %3515 = vmatpush1.xpose.msra.mxu0 0.0
  %3516 = vmatprep.subr.mxu0 0.0
  %3517 = vmatpush1.xpose.msra.mxu0 0.0
  %3518 = vmatprep.subr.mxu0 0.0
  %3519 = vmatpush1.xpose.msra.mxu0 0.0
  %3520 = vmatprep.subr.mxu0 0.0
  %3521 = vmatpush1.xpose.msra.mxu0 0.0
  %3522 = vmatprep.subr.mxu0 0.0
  %3523 = vmatpush1.xpose.msra.mxu0 0.0
  %3524 = vmatprep.subr.mxu0 0.0
  %3525 = vmatpush1.xpose.msra.mxu0 0.0
  %3526 = vmatprep.subr.mxu0 0.0
  %3527 = vmatpush1.xpose.msra.mxu0 0.0
  %3528 = vmatprep.subr.mxu0 0.0
  %3529 = vmatpush1.xpose.msra.mxu0 0.0
  %3530 = vmatprep.subr.mxu0 0.0
  %3531 = vmatpush1.xpose.msra.mxu0 0.0
  %3532 = vmatprep.subr.mxu0 0.0
  %3533 = vmatpush1.xpose.msra.mxu0 0.0
  %3534 = vmatprep.subr.mxu0 0.0
  %3535 = vmatpush1.xpose.msra.mxu0 0.0
  %3536 = vmatprep.subr.mxu0 0.0
  %3537 = vmatpush1.xpose.msra.mxu0 0.0
  %3538 = vmatprep.subr.mxu0 0.0
  %3539 = vmatpush1.xpose.msra.mxu0 0.0
  %3540 = vmatprep.subr.mxu0 0.0
  %3541 = vmatpush1.xpose.msra.mxu0 0.0
  %3542 = vmatprep.subr.mxu0 0.0
  %3543 = vmatpush1.xpose.msra.mxu0 0.0
  %3544 = vmatprep.subr.mxu0 0.0
  %3545 = vmatpush1.xpose.msra.mxu0 0.0
  %3546 = vmatprep.subr.mxu0 0.0
  %3547 = vmatpush1.xpose.msra.mxu0 0.0
  %3548 = vmatprep.subr.mxu0 0.0
  %3549 = vmatpush1.xpose.msra.mxu0 0.0
  %3550 = vmatprep.subr.mxu0 0.0
  %3551 = vmatpush1.xpose.msra.mxu0 0.0
  %3552 = vmatprep.subr.mxu0 0.0
  %3553 = vmatpush1.xpose.msra.mxu0 0.0
  %3554 = vmatprep.subr.mxu0 0.0
  %3555 = vmatpush1.xpose.msra.mxu0 0.0
  %3556 = vmatprep.subr.mxu0 0.0
  %3557 = vmatpush1.xpose.msra.mxu0 0.0
  %3558 = vmatprep.subr.mxu0 0.0
  %3559 = vmatpush1.xpose.msra.mxu0 0.0
  %3560 = vmatprep.subr.mxu0 0.0
  %3561 = vmatpush1.xpose.msra.mxu0 0.0
  %3562 = vmatprep.subr.mxu0 0.0
  %3563 = vmatpush1.xpose.msra.mxu0 0.0
  %3564 = vmatprep.subr.mxu0 0.0
  %3565 = vmatpush1.xpose.msra.mxu0 0.0
  %3566 = vmatprep.mubr.f32.mxu0 %v3499
  %3567 = vmatmul.mubr.f32.gmra.mrb[0].mxu0 %v3495
  %v3568 = vpop.f32.mrb[0].mxu0
  %v3569 = vadd.f32 %v3490, %v3568
  %v3570 = vpop.f32.mrb[0].mxu0
  %3571 = vdwg.mxu0
  %vm3572 = vcmask 122880
  %3573 = vst.msk [vmem:[%s9] sm:$0x1] %vm3572, %v3569
  // Predicated region
  $region38: #{_lambda_.1} parent=0 // pred_check
    _
  $region39: #{_lambda_.1} parent=0 // pred_check_branch
    %3575 = sbr.rel (0) target = $region41
  $region40: #{_lambda_.1} parent=0 // pred_region
    _
  $region41: #{_lambda_.1} parent=0 // pred_fallthru
    _
  // Predicated region
  $region42: #{_lambda_.1} parent=0 // pred_check
    _
  $region43: #{_lambda_.1} parent=0 // pred_check_branch
    %3577 = sbr.rel (0) target = $region45
  $region44: #{_lambda_.1} parent=0 // pred_region
    _
  $region45: #{_lambda_.1} parent=0 // pred_fallthru
    _

</llo_original>
